<compile_context>
chip_gen: v6e
topology: v6e:2x2x1
jax: 0.10.0
libtpu: 0.0.40
codegen_flags: <defaults>
</compile_context>

<pallas_src>
import functools
import math

import jax
import jax.numpy as jnp
import numpy as np
from jax.experimental import pallas as pl
from jax.experimental.pallas import tpu as pltpu

# ---- module hyper-parameters (globals in the reference PyTorch code) ----
d_model = 32
d_k = 8
d_v = 8
n_heads = 4

LN_EPS = 1e-5
MASK_FILL = -1000000000.0


def _choose_batch_tile(B, S):
    """Aim for ~128 rows per grid step (fills MXU sublanes), but keep at
    least 2 grid steps when the batch allows it (v7x has 2 TensorCores)."""
    target_rows = 128
    bt = max(1, min(B, target_rows // max(S, 1)))
    if B >= 2 and B // bt < 2:
        bt = max(1, B // 2)
    while B % bt != 0:
        bt -= 1
    return bt


def mha_kernel(q_ref, k_ref, v_ref, mask_ref,
               wq_ref, bq_ref, wk_ref, bk_ref, wv_ref, bv_ref,
               wo_ref, bo_ref, gamma_ref, beta_ref,
               out_ref, attn_ref, *, bt, seq):
    S = seq

    # Fold the bt batch elements into the sublane (row) dimension so every
    # projection matmul runs on bt*S rows at once.
    x_q = q_ref[...].reshape(bt * S, d_model).astype(jnp.float32)
    x_k = k_ref[...].reshape(bt * S, d_model).astype(jnp.float32)
    x_v = v_ref[...].reshape(bt * S, d_model).astype(jnp.float32)

    # QKV projections (x @ W + b); weights already stored [in, out].
    qs = jnp.dot(x_q, wq_ref[...], preferred_element_type=jnp.float32) + bq_ref[...]
    ks = jnp.dot(x_k, wk_ref[...], preferred_element_type=jnp.float32) + bk_ref[...]
    vs = jnp.dot(x_v, wv_ref[...], preferred_element_type=jnp.float32) + bv_ref[...]

    scale = 1.0 / math.sqrt(d_k)

    ctx_rows = []
    for b in range(bt):                              # static unroll over batch tile
        qs_b = qs[b * S:(b + 1) * S, :]              # (S, H*d_k)
        ks_b = ks[b * S:(b + 1) * S, :]
        vs_b = vs[b * S:(b + 1) * S, :]

        # (S, H*d) lane layout -> (H, S, d) head-major so attention runs as
        # batched contractions (one MXU pass per step instead of per head).
        qh = jnp.stack([qs_b[:, h * d_k:(h + 1) * d_k] for h in range(n_heads)], axis=0)
        kh = jnp.stack([ks_b[:, h * d_k:(h + 1) * d_k] for h in range(n_heads)], axis=0)
        vh = jnp.stack([vs_b[:, h * d_v:(h + 1) * d_v] for h in range(n_heads)], axis=0)

        # Batched scores, contracting the last dims directly (no kh.T).
        scores = jnp.einsum('hqd,hkd->hqk', qh, kh,
                            preferred_element_type=jnp.float32) * scale

        # Mask compare done once per batch element, shared across all heads.
        masked = mask_ref[b].astype(jnp.int32) != 0          # (S, S) bool
        scores = jnp.where(masked[None, :, :], MASK_FILL, scores)

        # Softmax along the key axis (matches nn.Softmax(dim=-1)); exact
        # division so the returned attention weights stay within 1e-5.
        m = jnp.max(scores, axis=-1, keepdims=True)
        e = jnp.exp(scores - m)
        attn = e / jnp.sum(e, axis=-1, keepdims=True)         # (H, S, S)

        attn_ref[b] = attn.astype(attn_ref.dtype)

        # Batched attn @ V, then back to (S, H*d_v) for the output projection.
        ctx = jnp.einsum('hqk,hkd->hqd', attn, vh,
                         preferred_element_type=jnp.float32)  # (H, S, d_v)
        ctx_rows.append(jnp.concatenate([ctx[h] for h in range(n_heads)], axis=-1))

    context = ctx_rows[0] if bt == 1 else jnp.concatenate(ctx_rows, axis=0)

    # Output projection + residual + LayerNorm over all bt*S rows at once.
    out = jnp.dot(context, wo_ref[...], preferred_element_type=jnp.float32) + bo_ref[...]
    y = out + x_q
    mean = jnp.mean(y, axis=-1, keepdims=True)
    var = jnp.mean((y - mean) ** 2, axis=-1, keepdims=True)
    y_norm = (y - mean) * jax.lax.rsqrt(var + LN_EPS)
    y_out = y_norm * gamma_ref[...] + beta_ref[...]
    out_ref[...] = y_out.reshape(bt, S, d_model).astype(out_ref.dtype)


def multi_head_attention(Q, K, V, attn_mask, params, batch_tile=None):
    """Q,K,V: (B,S,d_model) f32; attn_mask: (B,S,S) bool/int (nonzero = masked)."""
    B, S, D = Q.shape
    assert D == d_model

    wq, bq, wk, bk, wv, bv, wo, bo, gamma, beta = params

    # int8 mask: 4x less HBM->VMEM traffic / VMEM footprint than int32.
    mask_i8 = attn_mask.astype(jnp.int8)

    bt = batch_tile if batch_tile is not None else _choose_batch_tile(B, S)
    assert B % bt == 0
    grid = (B // bt,)

    per_step_3d = lambda b: (b, 0, 0)
    full2d = lambda b: (0, 0)

    out_shapes = (
        jax.ShapeDtypeStruct((B, S, d_model), jnp.float32),
        jax.ShapeDtypeStruct((B, n_heads, S, S), jnp.float32),
    )

    grid_spec = pltpu.PrefetchScalarGridSpec(
        num_scalar_prefetch=0,
        grid=grid,
        in_specs=[
            pl.BlockSpec((bt, S, d_model), per_step_3d),     # Q
            pl.BlockSpec((bt, S, d_model), per_step_3d),     # K
            pl.BlockSpec((bt, S, d_model), per_step_3d),     # V
            pl.BlockSpec((bt, S, S), per_step_3d),           # mask (int8)
            pl.BlockSpec((d_model, n_heads * d_k), full2d),  # W_Q (in,out)
            pl.BlockSpec((1, n_heads * d_k), full2d),        # b_Q
            pl.BlockSpec((d_model, n_heads * d_k), full2d),  # W_K
            pl.BlockSpec((1, n_heads * d_k), full2d),        # b_K
            pl.BlockSpec((d_model, n_heads * d_v), full2d),  # W_V
            pl.BlockSpec((1, n_heads * d_v), full2d),        # b_V
            pl.BlockSpec((n_heads * d_v, d_model), full2d),  # W_O (in,out)
            pl.BlockSpec((1, d_model), full2d),              # b_O
            pl.BlockSpec((1, d_model), full2d),              # ln gamma
            pl.BlockSpec((1, d_model), full2d),              # ln beta
        ],
        out_specs=[
            pl.BlockSpec((bt, S, d_model), per_step_3d),
            pl.BlockSpec((bt, n_heads, S, S), lambda b: (b, 0, 0, 0)),
        ],
    )

    kernel = functools.partial(mha_kernel, bt=bt, seq=S)

    return pl.pallas_call(
        kernel,
        out_shape=out_shapes,
        grid_spec=grid_spec,
        compiler_params=pltpu.CompilerParams(
            dimension_semantics=("parallel",)),
    )(Q, K, V, mask_i8, wq, bq, wk, bk, wv, bv, wo, bo, gamma, beta)


def init_params(key):
    """Deterministic parameter init (PyTorch Linear shapes, stored transposed)."""
    ks = jax.random.split(key, 8)

    def linear(kw, kb, fan_in, fan_out):
        bound = 1.0 / math.sqrt(fan_in)
        w = jax.random.uniform(kw, (fan_in, fan_out), jnp.float32, -bound, bound)
        b = jax.random.uniform(kb, (1, fan_out), jnp.float32, -bound, bound)
        return w, b

    wq, bq = linear(ks[0], ks[1], d_model, n_heads * d_k)
    wk, bk = linear(ks[2], ks[3], d_model, n_heads * d_k)
    wv, bv = linear(ks[4], ks[5], d_model, n_heads * d_v)
    wo, bo = linear(ks[6], ks[7], n_heads * d_v, d_model)
    gamma = jnp.ones((1, d_model), jnp.float32)
    beta = jnp.zeros((1, d_model), jnp.float32)
    return (wq, bq, wk, bk, wv, bv, wo, bo, gamma, beta)


def reference_mha(Q, K, V, mask_bool, params):
    """Pure-JAX reference mirroring the PyTorch forward."""
    wq, bq, wk, bk, wv, bv, wo, bo, gamma, beta = params
    B, S, _ = Q.shape
    qs = (Q @ wq + bq).reshape(B, S, n_heads, d_k).transpose(0, 2, 1, 3)
    ks_ = (K @ wk + bk).reshape(B, S, n_heads, d_k).transpose(0, 2, 1, 3)
    vs = (V @ wv + bv).reshape(B, S, n_heads, d_v).transpose(0, 2, 1, 3)
    scores = jnp.einsum('bhqd,bhkd->bhqk', qs, ks_) / np.sqrt(d_k)
    scores = jnp.where(mask_bool[:, None, :, :], MASK_FILL, scores)
    attn = jax.nn.softmax(scores, axis=-1)
    ctx = jnp.einsum('bhqk,bhkd->bhqd', attn, vs)
    ctx = ctx.transpose(0, 2, 1, 3).reshape(B, S, n_heads * d_v)
    out = ctx @ wo + bo
    y = out + Q
    mean = jnp.mean(y, axis=-1, keepdims=True)
    var = jnp.mean((y - mean) ** 2, axis=-1, keepdims=True)
    return (y - mean) / jnp.sqrt(var + LN_EPS) * gamma + beta, attn


if __name__ == "__main__":
    B, S = 2, 8
    key = jax.random.PRNGKey(0)
    k_q, k_k, k_v, k_m, k_p = jax.random.split(key, 5)

    Q = jax.random.normal(k_q, (B, S, d_model), jnp.float32)
    K = jax.random.normal(k_k, (B, S, d_model), jnp.float32)
    V = jax.random.normal(k_v, (B, S, d_model), jnp.float32)
    # boolean padding-style mask: True = masked out
    mask_bool = jax.random.bernoulli(k_m, 0.25, (B, S, S))

    params = init_params(k_p)

    out, attn = multi_head_attention(Q, K, V, mask_bool, params)
    out = jax.block_until_ready(out)
    attn = jax.block_until_ready(attn)

    # sanity check against pure-JAX reference
    ref_out, ref_attn = reference_mha(Q, K, V, mask_bool, params)
    assert out.shape == (B, S, d_model)
    assert attn.shape == (B, n_heads, S, S)
    np.testing.assert_allclose(np.asarray(out), np.asarray(ref_out), atol=1e-4, rtol=1e-4)
    np.testing.assert_allclose(np.asarray(attn), np.asarray(ref_attn), atol=1e-5, rtol=1e-4)

    print("KERNEL_OK")
</pallas_src>

<mosaic_0001>
module attributes {stable_mosaic.version = 11 : i64} {
  func.func @mha_kernel(%arg0: i32, %arg1: memref<1x8x32xf32, #tpu.memory_space<vmem>>, %arg2: memref<1x8x32xf32, #tpu.memory_space<vmem>>, %arg3: memref<1x8x32xf32, #tpu.memory_space<vmem>>, %arg4: memref<1x8x8xi8, #tpu.memory_space<vmem>>, %arg5: memref<32x32xf32, #tpu.memory_space<vmem>>, %arg6: memref<1x32xf32, #tpu.memory_space<vmem>>, %arg7: memref<32x32xf32, #tpu.memory_space<vmem>>, %arg8: memref<1x32xf32, #tpu.memory_space<vmem>>, %arg9: memref<32x32xf32, #tpu.memory_space<vmem>>, %arg10: memref<1x32xf32, #tpu.memory_space<vmem>>, %arg11: memref<32x32xf32, #tpu.memory_space<vmem>>, %arg12: memref<1x32xf32, #tpu.memory_space<vmem>>, %arg13: memref<1x32xf32, #tpu.memory_space<vmem>>, %arg14: memref<1x32xf32, #tpu.memory_space<vmem>>, %arg15: memref<1x8x32xf32, #tpu.memory_space<vmem>>, %arg16: memref<1x4x8x8xf32, #tpu.memory_space<vmem>>) attributes {dimension_semantics = [#tpu.dimension_semantics<parallel>], iteration_bounds = array<i64: 2>, scalar_prefetch = 0 : i64, scratch_operands = 0 : i64, tpu.core_type = #tpu.core_type<tc>, window_params = [{transform_indices = @transform_0, window_bounds = array<i64: 1, 8, 32>}, {transform_indices = @transform_1, window_bounds = array<i64: 1, 8, 32>}, {transform_indices = @transform_2, window_bounds = array<i64: 1, 8, 32>}, {transform_indices = @transform_3, window_bounds = array<i64: 1, 8, 8>}, {pipeline_mode = #tpu.pipeline_mode<synchronous>, transform_indices = @transform_4, window_bounds = array<i64: 32, 32>}, {pipeline_mode = #tpu.pipeline_mode<synchronous>, transform_indices = @transform_5, window_bounds = array<i64: 1, 32>}, {pipeline_mode = #tpu.pipeline_mode<synchronous>, transform_indices = @transform_6, window_bounds = array<i64: 32, 32>}, {pipeline_mode = #tpu.pipeline_mode<synchronous>, transform_indices = @transform_7, window_bounds = array<i64: 1, 32>}, {pipeline_mode = #tpu.pipeline_mode<synchronous>, transform_indices = @transform_8, window_bounds = array<i64: 32, 32>}, {pipeline_mode = #tpu.pipeline_mode<synchronous>, transform_indices = @transform_9, window_bounds = array<i64: 1, 32>}, {pipeline_mode = #tpu.pipeline_mode<synchronous>, transform_indices = @transform_10, window_bounds = array<i64: 32, 32>}, {pipeline_mode = #tpu.pipeline_mode<synchronous>, transform_indices = @transform_11, window_bounds = array<i64: 1, 32>}, {pipeline_mode = #tpu.pipeline_mode<synchronous>, transform_indices = @transform_12, window_bounds = array<i64: 1, 32>}, {pipeline_mode = #tpu.pipeline_mode<synchronous>, transform_indices = @transform_13, window_bounds = array<i64: 1, 32>}, {transform_indices = @transform_14, window_bounds = array<i64: 1, 8, 32>}, {transform_indices = @transform_15, window_bounds = array<i64: 1, 4, 8, 8>}]} {
    %c0 = arith.constant 0 : index
    %c0_0 = arith.constant 0 : index
    %c0_1 = arith.constant 0 : index
    %0 = vector.load %arg1[%c0, %c0_0, %c0_1] : memref<1x8x32xf32, #tpu.memory_space<vmem>>, vector<1x8x32xf32>
    %1 = vector.shape_cast %0 : vector<1x8x32xf32> to vector<8x32xf32>
    %c0_2 = arith.constant 0 : index
    %c0_3 = arith.constant 0 : index
    %c0_4 = arith.constant 0 : index
    %2 = vector.load %arg2[%c0_2, %c0_3, %c0_4] : memref<1x8x32xf32, #tpu.memory_space<vmem>>, vector<1x8x32xf32>
    %3 = vector.shape_cast %2 : vector<1x8x32xf32> to vector<8x32xf32>
    %c0_5 = arith.constant 0 : index
    %c0_6 = arith.constant 0 : index
    %c0_7 = arith.constant 0 : index
    %4 = vector.load %arg3[%c0_5, %c0_6, %c0_7] : memref<1x8x32xf32, #tpu.memory_space<vmem>>, vector<1x8x32xf32>
    %5 = vector.shape_cast %4 : vector<1x8x32xf32> to vector<8x32xf32>
    %c0_8 = arith.constant 0 : index
    %c0_9 = arith.constant 0 : index
    %6 = vector.load %arg5[%c0_8, %c0_9] : memref<32x32xf32, #tpu.memory_space<vmem>>, vector<32x32xf32>
    %cst = arith.constant dense<0.000000e+00> : vector<8x32xf32>
    %7 = tpu.matmul %1, %6, %cst {dimension_numbers = #tpu.dot_dimension_numbers<[1], [0], [0], [1], [0, 0, 1, 1], [], []>} : vector<8x32xf32>, vector<32x32xf32>, vector<8x32xf32> -> vector<8x32xf32>
    %c0_10 = arith.constant 0 : index
    %c0_11 = arith.constant 0 : index
    %8 = vector.load %arg6[%c0_10, %c0_11] : memref<1x32xf32, #tpu.memory_space<vmem>>, vector<1x32xf32>
    %9 = vector.broadcast %8 : vector<1x32xf32> to vector<8x32xf32>
    %10 = arith.addf %7, %9 : vector<8x32xf32>
    %c0_12 = arith.constant 0 : index
    %c0_13 = arith.constant 0 : index
    %11 = vector.load %arg7[%c0_12, %c0_13] : memref<32x32xf32, #tpu.memory_space<vmem>>, vector<32x32xf32>
    %cst_14 = arith.constant dense<0.000000e+00> : vector<8x32xf32>
    %12 = tpu.matmul %3, %11, %cst_14 {dimension_numbers = #tpu.dot_dimension_numbers<[1], [0], [0], [1], [0, 0, 1, 1], [], []>} : vector<8x32xf32>, vector<32x32xf32>, vector<8x32xf32> -> vector<8x32xf32>
    %c0_15 = arith.constant 0 : index
    %c0_16 = arith.constant 0 : index
    %13 = vector.load %arg8[%c0_15, %c0_16] : memref<1x32xf32, #tpu.memory_space<vmem>>, vector<1x32xf32>
    %14 = vector.broadcast %13 : vector<1x32xf32> to vector<8x32xf32>
    %15 = arith.addf %12, %14 : vector<8x32xf32>
    %c0_17 = arith.constant 0 : index
    %c0_18 = arith.constant 0 : index
    %16 = vector.load %arg9[%c0_17, %c0_18] : memref<32x32xf32, #tpu.memory_space<vmem>>, vector<32x32xf32>
    %cst_19 = arith.constant dense<0.000000e+00> : vector<8x32xf32>
    %17 = tpu.matmul %5, %16, %cst_19 {dimension_numbers = #tpu.dot_dimension_numbers<[1], [0], [0], [1], [0, 0, 1, 1], [], []>} : vector<8x32xf32>, vector<32x32xf32>, vector<8x32xf32> -> vector<8x32xf32>
    %c0_20 = arith.constant 0 : index
    %c0_21 = arith.constant 0 : index
    %18 = vector.load %arg10[%c0_20, %c0_21] : memref<1x32xf32, #tpu.memory_space<vmem>>, vector<1x32xf32>
    %19 = vector.broadcast %18 : vector<1x32xf32> to vector<8x32xf32>
    %20 = arith.addf %17, %19 : vector<8x32xf32>
    %21 = vector.extract_strided_slice %10 {offsets = [0, 0], sizes = [8, 8], strides = [1, 1]} : vector<8x32xf32> to vector<8x8xf32>
    %22 = vector.extract_strided_slice %10 {offsets = [0, 8], sizes = [8, 8], strides = [1, 1]} : vector<8x32xf32> to vector<8x8xf32>
    %23 = vector.extract_strided_slice %10 {offsets = [0, 16], sizes = [8, 8], strides = [1, 1]} : vector<8x32xf32> to vector<8x8xf32>
    %24 = vector.extract_strided_slice %10 {offsets = [0, 24], sizes = [8, 8], strides = [1, 1]} : vector<8x32xf32> to vector<8x8xf32>
    %25 = vector.shape_cast %21 : vector<8x8xf32> to vector<1x8x8xf32>
    %26 = vector.shape_cast %22 : vector<8x8xf32> to vector<1x8x8xf32>
    %27 = vector.shape_cast %23 : vector<8x8xf32> to vector<1x8x8xf32>
    %28 = vector.shape_cast %24 : vector<8x8xf32> to vector<1x8x8xf32>
    %29 = tpu.concatenate %25, %26, %27, %28 in 0 : vector<1x8x8xf32>, vector<1x8x8xf32>, vector<1x8x8xf32>, vector<1x8x8xf32> -> vector<4x8x8xf32>
    %30 = vector.extract_strided_slice %15 {offsets = [0, 0], sizes = [8, 8], strides = [1, 1]} : vector<8x32xf32> to vector<8x8xf32>
    %31 = vector.extract_strided_slice %15 {offsets = [0, 8], sizes = [8, 8], strides = [1, 1]} : vector<8x32xf32> to vector<8x8xf32>
    %32 = vector.extract_strided_slice %15 {offsets = [0, 16], sizes = [8, 8], strides = [1, 1]} : vector<8x32xf32> to vector<8x8xf32>
    %33 = vector.extract_strided_slice %15 {offsets = [0, 24], sizes = [8, 8], strides = [1, 1]} : vector<8x32xf32> to vector<8x8xf32>
    %34 = vector.shape_cast %30 : vector<8x8xf32> to vector<1x8x8xf32>
    %35 = vector.shape_cast %31 : vector<8x8xf32> to vector<1x8x8xf32>
    %36 = vector.shape_cast %32 : vector<8x8xf32> to vector<1x8x8xf32>
    %37 = vector.shape_cast %33 : vector<8x8xf32> to vector<1x8x8xf32>
    %38 = tpu.concatenate %34, %35, %36, %37 in 0 : vector<1x8x8xf32>, vector<1x8x8xf32>, vector<1x8x8xf32>, vector<1x8x8xf32> -> vector<4x8x8xf32>
    %39 = vector.extract_strided_slice %20 {offsets = [0, 0], sizes = [8, 8], strides = [1, 1]} : vector<8x32xf32> to vector<8x8xf32>
    %40 = vector.extract_strided_slice %20 {offsets = [0, 8], sizes = [8, 8], strides = [1, 1]} : vector<8x32xf32> to vector<8x8xf32>
    %41 = vector.extract_strided_slice %20 {offsets = [0, 16], sizes = [8, 8], strides = [1, 1]} : vector<8x32xf32> to vector<8x8xf32>
    %42 = vector.extract_strided_slice %20 {offsets = [0, 24], sizes = [8, 8], strides = [1, 1]} : vector<8x32xf32> to vector<8x8xf32>
    %43 = vector.shape_cast %39 : vector<8x8xf32> to vector<1x8x8xf32>
    %44 = vector.shape_cast %40 : vector<8x8xf32> to vector<1x8x8xf32>
    %45 = vector.shape_cast %41 : vector<8x8xf32> to vector<1x8x8xf32>
    %46 = vector.shape_cast %42 : vector<8x8xf32> to vector<1x8x8xf32>
    %47 = tpu.concatenate %43, %44, %45, %46 in 0 : vector<1x8x8xf32>, vector<1x8x8xf32>, vector<1x8x8xf32>, vector<1x8x8xf32> -> vector<4x8x8xf32>
    "tpu.trace_start"() <{level = 10 : i32, message = "hqd,hkd->hqk"}> : () -> ()
    %cst_22 = arith.constant dense<0.000000e+00> : vector<4x8x8xf32>
    %48 = tpu.matmul %29, %38, %cst_22 {dimension_numbers = #tpu.dot_dimension_numbers<[2], [2], [1], [1], [0, 0, 0, 1, 1, 1], [0], [0]>} : vector<4x8x8xf32>, vector<4x8x8xf32>, vector<4x8x8xf32> -> vector<4x8x8xf32>
    "tpu.trace_stop"() : () -> ()
    %cst_23 = arith.constant 0.353553385 : f32
    %49 = vector.broadcast %cst_23 : f32 to vector<4x8x8xf32>
    %50 = arith.mulf %48, %49 : vector<4x8x8xf32>
    %c0_24 = arith.constant 0 : index
    %c0_25 = arith.constant 0 : index
    %c0_26 = arith.constant 0 : index
    %51 = vector.load %arg4[%c0_24, %c0_25, %c0_26] : memref<1x8x8xi8, #tpu.memory_space<vmem>>, vector<1x8x8xi8>
    %52 = vector.shape_cast %51 : vector<1x8x8xi8> to vector<8x8xi8>
    %53 = arith.extsi %52 : vector<8x8xi8> to vector<8x8xi32>
    %c0_i32 = arith.constant 0 : i32
    %54 = vector.broadcast %c0_i32 : i32 to vector<8x8xi32>
    %55 = arith.cmpi ne, %53, %54 : vector<8x8xi32>
    %56 = vector.shape_cast %55 : vector<8x8xi1> to vector<1x8x8xi1>
    %cst_27 = arith.constant -1.000000e+09 : f32
    %57 = vector.shape_cast %56 : vector<1x8x8xi1> to vector<1x8x8xi1>
    %58 = vector.broadcast %57 : vector<1x8x8xi1> to vector<4x8x8xi1>
    %59 = vector.broadcast %cst_27 : f32 to vector<4x8x8xf32>
    %60 = arith.select %58, %59, %50 : vector<4x8x8xi1>, vector<4x8x8xf32>
    %cst_28 = arith.constant dense<0xFF800000> : vector<4x8xf32>
    %61 = vector.multi_reduction <maximumf>, %60, %cst_28 [2] : vector<4x8x8xf32> to vector<4x8xf32>
    %62 = vector.shape_cast %61 : vector<4x8xf32> to vector<4x8x1xf32>
    %63 = vector.broadcast %62 : vector<4x8x1xf32> to vector<4x8x8xf32>
    %64 = arith.subf %60, %63 : vector<4x8x8xf32>
    %65 = math.exp %64 : vector<4x8x8xf32>
    %cst_29 = arith.constant dense<0.000000e+00> : vector<4x8xf32>
    %66 = vector.multi_reduction <add>, %65, %cst_29 [2] : vector<4x8x8xf32> to vector<4x8xf32>
    %67 = vector.shape_cast %66 : vector<4x8xf32> to vector<4x8x1xf32>
    %68 = vector.broadcast %67 : vector<4x8x1xf32> to vector<4x8x8xf32>
    %69 = arith.divf %65, %68 : vector<4x8x8xf32>
    %c0_30 = arith.constant 0 : index
    %c0_31 = arith.constant 0 : index
    %c0_32 = arith.constant 0 : index
    %c0_33 = arith.constant 0 : index
    %70 = vector.load %arg16[%c0_30, %c0_31, %c0_32, %c0_33] : memref<1x4x8x8xf32, #tpu.memory_space<vmem>>, vector<1x4x8x8xf32>
    %71 = vector.shape_cast %70 : vector<1x4x8x8xf32> to vector<4x8x8xf32>
    %72 = vector.shape_cast %69 : vector<4x8x8xf32> to vector<1x4x8x8xf32>
    tpu.vector_store %arg16[%c0_30, %c0_31, %c0_32, %c0_33], %72 {strides = array<i32>} : memref<1x4x8x8xf32, #tpu.memory_space<vmem>>, vector<1x4x8x8xf32>,
    "tpu.trace_start"() <{level = 10 : i32, message = "hqk,hkd->hqd"}> : () -> ()
    %cst_34 = arith.constant dense<0.000000e+00> : vector<4x8x8xf32>
    %73 = tpu.matmul %69, %47, %cst_34 {dimension_numbers = #tpu.dot_dimension_numbers<[2], [1], [1], [2], [0, 0, 0, 1, 1, 2], [0], [0]>} : vector<4x8x8xf32>, vector<4x8x8xf32>, vector<4x8x8xf32> -> vector<4x8x8xf32>
    "tpu.trace_stop"() : () -> ()
    %74 = vector.extract_strided_slice %73 {offsets = [0, 0, 0], sizes = [1, 8, 8], strides = [1, 1, 1]} : vector<4x8x8xf32> to vector<1x8x8xf32>
    %75 = vector.shape_cast %74 : vector<1x8x8xf32> to vector<8x8xf32>
    %76 = vector.extract_strided_slice %73 {offsets = [1, 0, 0], sizes = [1, 8, 8], strides = [1, 1, 1]} : vector<4x8x8xf32> to vector<1x8x8xf32>
    %77 = vector.shape_cast %76 : vector<1x8x8xf32> to vector<8x8xf32>
    %78 = vector.extract_strided_slice %73 {offsets = [2, 0, 0], sizes = [1, 8, 8], strides = [1, 1, 1]} : vector<4x8x8xf32> to vector<1x8x8xf32>
    %79 = vector.shape_cast %78 : vector<1x8x8xf32> to vector<8x8xf32>
    %80 = vector.extract_strided_slice %73 {offsets = [3, 0, 0], sizes = [1, 8, 8], strides = [1, 1, 1]} : vector<4x8x8xf32> to vector<1x8x8xf32>
    %81 = vector.shape_cast %80 : vector<1x8x8xf32> to vector<8x8xf32>
    %82 = tpu.concatenate %75, %77, %79, %81 in 1 : vector<8x8xf32>, vector<8x8xf32>, vector<8x8xf32>, vector<8x8xf32> -> vector<8x32xf32>
    %c0_35 = arith.constant 0 : index
    %c0_36 = arith.constant 0 : index
    %83 = vector.load %arg11[%c0_35, %c0_36] : memref<32x32xf32, #tpu.memory_space<vmem>>, vector<32x32xf32>
    %cst_37 = arith.constant dense<0.000000e+00> : vector<8x32xf32>
    %84 = tpu.matmul %82, %83, %cst_37 {dimension_numbers = #tpu.dot_dimension_numbers<[1], [0], [0], [1], [0, 0, 1, 1], [], []>} : vector<8x32xf32>, vector<32x32xf32>, vector<8x32xf32> -> vector<8x32xf32>
    %c0_38 = arith.constant 0 : index
    %c0_39 = arith.constant 0 : index
    %85 = vector.load %arg12[%c0_38, %c0_39] : memref<1x32xf32, #tpu.memory_space<vmem>>, vector<1x32xf32>
    %86 = vector.broadcast %85 : vector<1x32xf32> to vector<8x32xf32>
    %87 = arith.addf %84, %86 : vector<8x32xf32>
    %88 = arith.addf %87, %1 : vector<8x32xf32>
    %cst_40 = arith.constant dense<0.000000e+00> : vector<8xf32>
    %89 = vector.multi_reduction <add>, %88, %cst_40 [1] : vector<8x32xf32> to vector<8xf32>
    %90 = vector.shape_cast %89 : vector<8xf32> to vector<8x1xf32>
    %cst_41 = arith.constant 3.200000e+01 : f32
    %91 = vector.broadcast %cst_41 : f32 to vector<8x1xf32>
    %92 = arith.divf %90, %91 : vector<8x1xf32>
    %93 = vector.broadcast %92 : vector<8x1xf32> to vector<8x32xf32>
    %94 = arith.subf %88, %93 : vector<8x32xf32>
    %95 = arith.mulf %94, %94 : vector<8x32xf32>
    %cst_42 = arith.constant dense<0.000000e+00> : vector<8xf32>
    %96 = vector.multi_reduction <add>, %95, %cst_42 [1] : vector<8x32xf32> to vector<8xf32>
    %97 = vector.shape_cast %96 : vector<8xf32> to vector<8x1xf32>
    %cst_43 = arith.constant 3.200000e+01 : f32
    %98 = vector.broadcast %cst_43 : f32 to vector<8x1xf32>
    %99 = arith.divf %97, %98 : vector<8x1xf32>
    %100 = vector.broadcast %92 : vector<8x1xf32> to vector<8x32xf32>
    %101 = arith.subf %88, %100 : vector<8x32xf32>
    %cst_44 = arith.constant 9.99999974E-6 : f32
    %102 = vector.broadcast %cst_44 : f32 to vector<8x1xf32>
    %103 = arith.addf %99, %102 : vector<8x1xf32>
    %104 = math.rsqrt %103 : vector<8x1xf32>
    %105 = vector.broadcast %104 : vector<8x1xf32> to vector<8x32xf32>
    %106 = arith.mulf %101, %105 : vector<8x32xf32>
    %c0_45 = arith.constant 0 : index
    %c0_46 = arith.constant 0 : index
    %107 = vector.load %arg13[%c0_45, %c0_46] : memref<1x32xf32, #tpu.memory_space<vmem>>, vector<1x32xf32>
    %108 = vector.broadcast %107 : vector<1x32xf32> to vector<8x32xf32>
    %109 = arith.mulf %106, %108 : vector<8x32xf32>
    %c0_47 = arith.constant 0 : index
    %c0_48 = arith.constant 0 : index
    %110 = vector.load %arg14[%c0_47, %c0_48] : memref<1x32xf32, #tpu.memory_space<vmem>>, vector<1x32xf32>
    %111 = vector.broadcast %110 : vector<1x32xf32> to vector<8x32xf32>
    %112 = arith.addf %109, %111 : vector<8x32xf32>
    %113 = vector.shape_cast %112 : vector<8x32xf32> to vector<1x8x32xf32>
    %c0_49 = arith.constant 0 : index
    %c0_50 = arith.constant 0 : index
    %c0_51 = arith.constant 0 : index
    %114 = vector.load %arg15[%c0_49, %c0_50, %c0_51] : memref<1x8x32xf32, #tpu.memory_space<vmem>>, vector<1x8x32xf32>
    tpu.vector_store %arg15[%c0_49, %c0_50, %c0_51], %113 {strides = array<i32>} : memref<1x8x32xf32, #tpu.memory_space<vmem>>, vector<1x8x32xf32>,
    return
  }
  func.func @transform_0(%arg0: i32) -> (i32, i32, i32) {
    %c0_i32 = arith.constant 0 : i32
    %c0_i32_0 = arith.constant 0 : i32
    %c0_i32_1 = arith.constant 0 : i32
    return %arg0, %c0_i32, %c0_i32_0 : i32, i32, i32
  }
  func.func @transform_1(%arg0: i32) -> (i32, i32, i32) {
    %c0_i32 = arith.constant 0 : i32
    %c0_i32_0 = arith.constant 0 : i32
    %c0_i32_1 = arith.constant 0 : i32
    return %arg0, %c0_i32, %c0_i32_0 : i32, i32, i32
  }
  func.func @transform_2(%arg0: i32) -> (i32, i32, i32) {
    %c0_i32 = arith.constant 0 : i32
    %c0_i32_0 = arith.constant 0 : i32
    %c0_i32_1 = arith.constant 0 : i32
    return %arg0, %c0_i32, %c0_i32_0 : i32, i32, i32
  }
  func.func @transform_3(%arg0: i32) -> (i32, i32, i32) {
    %c0_i32 = arith.constant 0 : i32
    %c0_i32_0 = arith.constant 0 : i32
    %c0_i32_1 = arith.constant 0 : i32
    return %arg0, %c0_i32, %c0_i32_0 : i32, i32, i32
  }
  func.func @transform_4(%arg0: i32) -> (i32, i32) {
    %c0_i32 = arith.constant 0 : i32
    %c0_i32_0 = arith.constant 0 : i32
    %c0_i32_1 = arith.constant 0 : i32
    return %c0_i32, %c0_i32_0 : i32, i32
  }
  func.func @transform_5(%arg0: i32) -> (i32, i32) {
    %c0_i32 = arith.constant 0 : i32
    %c0_i32_0 = arith.constant 0 : i32
    %c0_i32_1 = arith.constant 0 : i32
    return %c0_i32, %c0_i32_0 : i32, i32
  }
  func.func @transform_6(%arg0: i32) -> (i32, i32) {
    %c0_i32 = arith.constant 0 : i32
    %c0_i32_0 = arith.constant 0 : i32
    %c0_i32_1 = arith.constant 0 : i32
    return %c0_i32, %c0_i32_0 : i32, i32
  }
  func.func @transform_7(%arg0: i32) -> (i32, i32) {
    %c0_i32 = arith.constant 0 : i32
    %c0_i32_0 = arith.constant 0 : i32
    %c0_i32_1 = arith.constant 0 : i32
    return %c0_i32, %c0_i32_0 : i32, i32
  }
  func.func @transform_8(%arg0: i32) -> (i32, i32) {
    %c0_i32 = arith.constant 0 : i32
    %c0_i32_0 = arith.constant 0 : i32
    %c0_i32_1 = arith.constant 0 : i32
    return %c0_i32, %c0_i32_0 : i32, i32
  }
  func.func @transform_9(%arg0: i32) -> (i32, i32) {
    %c0_i32 = arith.constant 0 : i32
    %c0_i32_0 = arith.constant 0 : i32
    %c0_i32_1 = arith.constant 0 : i32
    return %c0_i32, %c0_i32_0 : i32, i32
  }
  func.func @transform_10(%arg0: i32) -> (i32, i32) {
    %c0_i32 = arith.constant 0 : i32
    %c0_i32_0 = arith.constant 0 : i32
    %c0_i32_1 = arith.constant 0 : i32
    return %c0_i32, %c0_i32_0 : i32, i32
  }
  func.func @transform_11(%arg0: i32) -> (i32, i32) {
    %c0_i32 = arith.constant 0 : i32
    %c0_i32_0 = arith.constant 0 : i32
    %c0_i32_1 = arith.constant 0 : i32
    return %c0_i32, %c0_i32_0 : i32, i32
  }
  func.func @transform_12(%arg0: i32) -> (i32, i32) {
    %c0_i32 = arith.constant 0 : i32
    %c0_i32_0 = arith.constant 0 : i32
    %c0_i32_1 = arith.constant 0 : i32
    return %c0_i32, %c0_i32_0 : i32, i32
  }
  func.func @transform_13(%arg0: i32) -> (i32, i32) {
    %c0_i32 = arith.constant 0 : i32
    %c0_i32_0 = arith.constant 0 : i32
    %c0_i32_1 = arith.constant 0 : i32
    return %c0_i32, %c0_i32_0 : i32, i32
  }
  func.func @transform_14(%arg0: i32) -> (i32, i32, i32) {
    %c0_i32 = arith.constant 0 : i32
    %c0_i32_0 = arith.constant 0 : i32
    %c0_i32_1 = arith.constant 0 : i32
    return %arg0, %c0_i32, %c0_i32_0 : i32, i32, i32
  }
  func.func @transform_15(%arg0: i32) -> (i32, i32, i32, i32) {
    %c0_i32 = arith.constant 0 : i32
    %c0_i32_0 = arith.constant 0 : i32
    %c0_i32_1 = arith.constant 0 : i32
    %c0_i32_2 = arith.constant 0 : i32
    return %arg0, %c0_i32, %c0_i32_0, %c0_i32_1 : i32, i32, i32, i32
  }
}

</mosaic_0001>

<llo_original>
// kernel: tpu_custom_call.1
$region0: #{tpu_custom_call.1}
  #allocation0 [shape = 'u32[]', space=smem, size = 0x4, offset = 0x4, fixed_abs, tag = 'smem constant byte address 0x4 - core index']
  #allocation1 [shape = 'u32[144,128]{1,0:T(1,128)}', space=vmem, size = 0x12000, scoped, tag = 'internal scratch']
  %s0 = inlined_call_operand.hbm [shape: f32[2,8,32], index: 0, kind: input, shape index: {}]
  %s1 = inlined_call_operand.hbm [shape: f32[2,8,32], index: 1, kind: input, shape index: {}]
  %s2 = inlined_call_operand.hbm [shape: f32[2,8,32], index: 2, kind: input, shape index: {}]
  %s3 = inlined_call_operand.vmem [shape: s8[2,8,8], index: 3, kind: input, shape index: {}]
  %s4 = inlined_call_operand.hbm [shape: f32[32,32], index: 4, kind: input, shape index: {}]
  %s5 = inlined_call_operand.vmem [shape: f32[1,32], index: 5, kind: input, shape index: {}]
  %s6 = inlined_call_operand.hbm [shape: f32[32,32], index: 6, kind: input, shape index: {}]
  %s7 = inlined_call_operand.vmem [shape: f32[1,32], index: 7, kind: input, shape index: {}]
  %s8 = inlined_call_operand.hbm [shape: f32[32,32], index: 8, kind: input, shape index: {}]
  %s9 = inlined_call_operand.vmem [shape: f32[1,32], index: 9, kind: input, shape index: {}]
  %s10 = inlined_call_operand.hbm [shape: f32[32,32], index: 10, kind: input, shape index: {}]
  %s11 = inlined_call_operand.vmem [shape: f32[1,32], index: 11, kind: input, shape index: {}]
  %s12 = inlined_call_operand.vmem [shape: f32[1,32], index: 12, kind: input, shape index: {}]
  %s13 = inlined_call_operand.vmem [shape: f32[1,32], index: 13, kind: input, shape index: {}]
  %s14 = inlined_call_operand.hbm [shape: f32[2,8,32], index: 14, kind: output, shape index: {0}]
  %s15 = inlined_call_operand.hbm [shape: f32[2,4,8,8], index: 15, kind: output, shape index: {1}]
  %16 = xla_tuple %s14, %s15
  %s17 = sld [smem:[#allocation0]]
  $region125: #{tpu_custom_call.1} parent=0
    _
  %s19 = ssub.s32 1, %s17
  %s20 = scalar_select 0, %s19, %s17
  $region1: #{tpu_custom_call.1} parent=0
    #allocation2 [shape = 'u8[8192]{0}', space=vmem, size = 0x2000, scoped, tag = 'input window, operand 0']
    #allocation3 [shape = 's32[2]{0}', space=sflag, size = 0x8, scoped, tag = 'scoped memory for tpu_custom_call.1']
    #allocation4 [shape = 's32[2]{0}', space=sflag, size = 0x8, scoped, tag = 'scoped memory for tpu_custom_call.1']
    #allocation5 [shape = 'u8[8192]{0}', space=vmem, size = 0x2000, scoped, tag = 'input window, operand 1']
    #allocation6 [shape = 's32[2]{0}', space=sflag, size = 0x8, scoped, tag = 'scoped memory for tpu_custom_call.1']
    #allocation7 [shape = 'u8[8192]{0}', space=vmem, size = 0x2000, scoped, tag = 'input window, operand 2']
    #allocation8 [shape = 'u8[16384]{0}', space=vmem, size = 0x4000, scoped, tag = 'input window, operand 4, single buffered']
    #allocation9 [shape = 's32[1]{0}', space=sflag, size = 0x4, scoped, tag = 'scoped memory for tpu_custom_call.1']
    #allocation10 [shape = 'u8[16384]{0}', space=vmem, size = 0x4000, scoped, tag = 'input window, operand 6, single buffered']
    #allocation11 [shape = 'u8[16384]{0}', space=vmem, size = 0x4000, scoped, tag = 'input window, operand 8, single buffered']
    #allocation12 [shape = 's32[1]{0}', space=sflag, size = 0x4, scoped, tag = 'scoped memory for tpu_custom_call.1']
    #allocation13 [shape = 'u8[16384]{0}', space=vmem, size = 0x4000, scoped, tag = 'input window, operand 10, single buffered']
    #allocation14 [shape = 'u8[8192]{0}', space=vmem, size = 0x2000, scoped, tag = 'output window, operand 0']
    #allocation15 [shape = 'u8[32768]{0}', space=vmem, size = 0x8000, scoped, tag = 'output window, operand 1']
    #allocation16 [shape = 's32[2]{0}', space=sflag, size = 0x8, scoped, tag = 'scoped memory for tpu_custom_call.1']
    %21 = vsyncpa [#allocation3], 0
    %s22 = scalar_lea.sflag [#allocation3], 1
    %23 = vsyncpa %s22, 0
    %24 = vsyncpa [#allocation6], 0
    %s25 = scalar_lea.sflag [#allocation6], 1
    %26 = vsyncpa %s25, 0
    %27 = vsyncpa [#allocation9], 0
    %28 = vsyncpa [#allocation12], 0
    %29 = vsyncpa [#allocation4], 0
    %s30 = scalar_lea.sflag [#allocation4], 1
    %31 = vsyncpa %s30, 0
    %32 = vsyncpa [#allocation16], 0
    %s33 = scalar_lea.sflag [#allocation16], 1
    %34 = vsyncpa %s33, 0
    loop: start=0, step=1, limit=4
    $region2: #{tpu_custom_call.1} parent=1 // loop_pre_header
      _
    $region3: #{tpu_custom_call.1} parent=1 // loop_header
      %s36 = sphi 0, %s40
      %p37 = scmp.ge.s32.totalorder %s36, 4
      %s46 = sphi 0, %s48
      %s49 = sphi 0, %s46
      %s50 = sphi 0, %s49
      %s66 = sphi 0, %s50
      %s72 = sphi 0, %s74
      %s75 = sphi 0, %s72
      %s76 = sphi 0, %s75
      %s92 = sphi 0, %s76
      %s98 = sphi 0, %s100
      %s101 = sphi 0, %s98
      %s102 = sphi 0, %s101
      %s118 = sphi 0, %s102
      %s124 = sphi 0, %s126
      %s127 = sphi 0, %s124
      %s128 = sphi 0, %s127
      %s144 = sphi 0, %s128
      %s148 = sphi 0, %s148
      %s150 = sphi 0, %s148
      %s151 = sphi 0, %s150
      %s165 = sphi 0, %s151
      %s169 = sphi 0, %s169
      %s171 = sphi 0, %s169
      %s172 = sphi 0, %s171
      %s186 = sphi 0, %s172
      %s190 = sphi 0, %s190
      %s192 = sphi 0, %s190
      %s193 = sphi 0, %s192
      %s207 = sphi 0, %s193
      %s211 = sphi 0, %s211
      %s213 = sphi 0, %s211
      %s214 = sphi 0, %s213
      %s228 = sphi 0, %s214
      %s232 = sphi 0, %s232
      %s234 = sphi 0, %s232
      %s235 = sphi 0, %s234
      %s249 = sphi 0, %s235
      %s253 = sphi 0, %s253
      %s255 = sphi 0, %s253
      %s256 = sphi 0, %s255
      %s270 = sphi 0, %s256
      %s274 = sphi 0, %s274
      %s276 = sphi 0, %s274
      %s277 = sphi 0, %s276
      %s291 = sphi 0, %s277
      %s295 = sphi 0, %s295
      %s297 = sphi 0, %s295
      %s298 = sphi 0, %s297
      %s312 = sphi 0, %s298
      %s316 = sphi 0, %s316
      %s318 = sphi 0, %s316
      %s319 = sphi 0, %s318
      %s333 = sphi 0, %s319
      %s337 = sphi 0, %s337
      %s339 = sphi 0, %s337
      %s340 = sphi 0, %s339
      %s354 = sphi 0, %s340
      %s360 = sphi 0, %s362
      %s363 = sphi 0, %s360
      %s364 = sphi 0, %s363
      %s380 = sphi 0, %s364
      %s386 = sphi 0, %s388
      %s389 = sphi 0, %s386
      %s390 = sphi 0, %s389
      %s406 = sphi 0, %s390
    $region4: #{tpu_custom_call.1} parent=1 // loop_header_branch
      %39 = sbr.rel (%p37) target = $region8
    $region5: #{tpu_custom_call.1} parent=1 // loop_body
      %s41 = ssub.s32 %s36, 1
      %s42 = ssub.s32 %s36, 2
      %s43 = sadd.s32 %s36, 1
      %s44 = ssub.s32 %s36, %s43
      %p45 = scmp.eq.s32.totalorder %s44, 0
      %s47 = sadd.s32 %s46, 1
      %s48 = scalar_select %p45, %s46, %s47
      %p51 = pneg %p45
      %p52 = scmp.eq.s32.totalorder %s36, 1
      %p53 = por %p51, %p52
      %p54 = scmp.ne.s32.totalorder %s46, %s49
      %p55 = scmp.eq.s32.totalorder %s36, 0
      %p56 = por %p54, %p55
      %p57 = scmp.ne.s32.totalorder %s46, %s49
      %p58 = scmp.eq.s32.totalorder %s41, 1
      %p59 = por %p57, %p58
      %p60 = scmp.ne.s32.totalorder %s49, %s50
      %p61 = scmp.eq.s32.totalorder %s41, 0
      %p62 = por %p60, %p61
      %p63 = scmp.ne.s32.totalorder %s49, %s50
      %p64 = scmp.eq.s32.totalorder %s42, 1
      %p65 = por %p63, %p64
      %p67 = scmp.ne.s32.totalorder %s50, %s66
      %p68 = scmp.eq.s32.totalorder %s42, 0
      %p69 = por %p67, %p68
      %s70 = ssub.s32 %s36, %s43
      %p71 = scmp.eq.s32.totalorder %s70, 0
      %s73 = sadd.s32 %s72, 1
      %s74 = scalar_select %p71, %s72, %s73
      %p77 = pneg %p71
      %p78 = scmp.eq.s32.totalorder %s36, 1
      %p79 = por %p77, %p78
      %p80 = scmp.ne.s32.totalorder %s72, %s75
      %p81 = scmp.eq.s32.totalorder %s36, 0
      %p82 = por %p80, %p81
      %p83 = scmp.ne.s32.totalorder %s72, %s75
      %p84 = scmp.eq.s32.totalorder %s41, 1
      %p85 = por %p83, %p84
      %p86 = scmp.ne.s32.totalorder %s75, %s76
      %p87 = scmp.eq.s32.totalorder %s41, 0
      %p88 = por %p86, %p87
      %p89 = scmp.ne.s32.totalorder %s75, %s76
      %p90 = scmp.eq.s32.totalorder %s42, 1
      %p91 = por %p89, %p90
      %p93 = scmp.ne.s32.totalorder %s76, %s92
      %p94 = scmp.eq.s32.totalorder %s42, 0
      %p95 = por %p93, %p94
      %s96 = ssub.s32 %s36, %s43
      %p97 = scmp.eq.s32.totalorder %s96, 0
      %s99 = sadd.s32 %s98, 1
      %s100 = scalar_select %p97, %s98, %s99
      %p103 = pneg %p97
      %p104 = scmp.eq.s32.totalorder %s36, 1
      %p105 = por %p103, %p104
      %p106 = scmp.ne.s32.totalorder %s98, %s101
      %p107 = scmp.eq.s32.totalorder %s36, 0
      %p108 = por %p106, %p107
      %p109 = scmp.ne.s32.totalorder %s98, %s101
      %p110 = scmp.eq.s32.totalorder %s41, 1
      %p111 = por %p109, %p110
      %p112 = scmp.ne.s32.totalorder %s101, %s102
      %p113 = scmp.eq.s32.totalorder %s41, 0
      %p114 = por %p112, %p113
      %p115 = scmp.ne.s32.totalorder %s101, %s102
      %p116 = scmp.eq.s32.totalorder %s42, 1
      %p117 = por %p115, %p116
      %p119 = scmp.ne.s32.totalorder %s102, %s118
      %p120 = scmp.eq.s32.totalorder %s42, 0
      %p121 = por %p119, %p120
      %s122 = ssub.s32 %s36, %s43
      %p123 = scmp.eq.s32.totalorder %s122, 0
      %s125 = sadd.s32 %s124, 1
      %s126 = scalar_select %p123, %s124, %s125
      %p129 = pneg %p123
      %p130 = scmp.eq.s32.totalorder %s36, 1
      %p131 = por %p129, %p130
      %p132 = scmp.ne.s32.totalorder %s124, %s127
      %p133 = scmp.eq.s32.totalorder %s36, 0
      %p134 = por %p132, %p133
      %p135 = scmp.ne.s32.totalorder %s124, %s127
      %p136 = scmp.eq.s32.totalorder %s41, 1
      %p137 = por %p135, %p136
      %p138 = scmp.ne.s32.totalorder %s127, %s128
      %p139 = scmp.eq.s32.totalorder %s41, 0
      %p140 = por %p138, %p139
      %p141 = scmp.ne.s32.totalorder %s127, %s128
      %p142 = scmp.eq.s32.totalorder %s42, 1
      %p143 = por %p141, %p142
      %p145 = scmp.ne.s32.totalorder %s128, %s144
      %p146 = scmp.eq.s32.totalorder %s42, 0
      %p147 = por %p145, %p146
      %s149 = sadd.s32 %s148, 1
      %p152 = scmp.eq.s32.totalorder %s36, 1
      %p153 = scmp.ne.s32.totalorder %s148, %s150
      %p154 = scmp.eq.s32.totalorder %s36, 0
      %p155 = por %p153, %p154
      %p156 = scmp.ne.s32.totalorder %s148, %s150
      %p157 = scmp.eq.s32.totalorder %s41, 1
      %p158 = por %p156, %p157
      %p159 = scmp.ne.s32.totalorder %s150, %s151
      %p160 = scmp.eq.s32.totalorder %s41, 0
      %p161 = por %p159, %p160
      %p162 = scmp.ne.s32.totalorder %s150, %s151
      %p163 = scmp.eq.s32.totalorder %s42, 1
      %p164 = por %p162, %p163
      %p166 = scmp.ne.s32.totalorder %s151, %s165
      %p167 = scmp.eq.s32.totalorder %s42, 0
      %p168 = por %p166, %p167
      %s170 = sadd.s32 %s169, 1
      %p173 = scmp.eq.s32.totalorder %s36, 1
      %p174 = scmp.ne.s32.totalorder %s169, %s171
      %p175 = scmp.eq.s32.totalorder %s36, 0
      %p176 = por %p174, %p175
      %p177 = scmp.ne.s32.totalorder %s169, %s171
      %p178 = scmp.eq.s32.totalorder %s41, 1
      %p179 = por %p177, %p178
      %p180 = scmp.ne.s32.totalorder %s171, %s172
      %p181 = scmp.eq.s32.totalorder %s41, 0
      %p182 = por %p180, %p181
      %p183 = scmp.ne.s32.totalorder %s171, %s172
      %p184 = scmp.eq.s32.totalorder %s42, 1
      %p185 = por %p183, %p184
      %p187 = scmp.ne.s32.totalorder %s172, %s186
      %p188 = scmp.eq.s32.totalorder %s42, 0
      %p189 = por %p187, %p188
      %s191 = sadd.s32 %s190, 1
      %p194 = scmp.eq.s32.totalorder %s36, 1
      %p195 = scmp.ne.s32.totalorder %s190, %s192
      %p196 = scmp.eq.s32.totalorder %s36, 0
      %p197 = por %p195, %p196
      %p198 = scmp.ne.s32.totalorder %s190, %s192
      %p199 = scmp.eq.s32.totalorder %s41, 1
      %p200 = por %p198, %p199
      %p201 = scmp.ne.s32.totalorder %s192, %s193
      %p202 = scmp.eq.s32.totalorder %s41, 0
      %p203 = por %p201, %p202
      %p204 = scmp.ne.s32.totalorder %s192, %s193
      %p205 = scmp.eq.s32.totalorder %s42, 1
      %p206 = por %p204, %p205
      %p208 = scmp.ne.s32.totalorder %s193, %s207
      %p209 = scmp.eq.s32.totalorder %s42, 0
      %p210 = por %p208, %p209
      %s212 = sadd.s32 %s211, 1
      %p215 = scmp.eq.s32.totalorder %s36, 1
      %p216 = scmp.ne.s32.totalorder %s211, %s213
      %p217 = scmp.eq.s32.totalorder %s36, 0
      %p218 = por %p216, %p217
      %p219 = scmp.ne.s32.totalorder %s211, %s213
      %p220 = scmp.eq.s32.totalorder %s41, 1
      %p221 = por %p219, %p220
      %p222 = scmp.ne.s32.totalorder %s213, %s214
      %p223 = scmp.eq.s32.totalorder %s41, 0
      %p224 = por %p222, %p223
      %p225 = scmp.ne.s32.totalorder %s213, %s214
      %p226 = scmp.eq.s32.totalorder %s42, 1
      %p227 = por %p225, %p226
      %p229 = scmp.ne.s32.totalorder %s214, %s228
      %p230 = scmp.eq.s32.totalorder %s42, 0
      %p231 = por %p229, %p230
      %s233 = sadd.s32 %s232, 1
      %p236 = scmp.eq.s32.totalorder %s36, 1
      %p237 = scmp.ne.s32.totalorder %s232, %s234
      %p238 = scmp.eq.s32.totalorder %s36, 0
      %p239 = por %p237, %p238
      %p240 = scmp.ne.s32.totalorder %s232, %s234
      %p241 = scmp.eq.s32.totalorder %s41, 1
      %p242 = por %p240, %p241
      %p243 = scmp.ne.s32.totalorder %s234, %s235
      %p244 = scmp.eq.s32.totalorder %s41, 0
      %p245 = por %p243, %p244
      %p246 = scmp.ne.s32.totalorder %s234, %s235
      %p247 = scmp.eq.s32.totalorder %s42, 1
      %p248 = por %p246, %p247
      %p250 = scmp.ne.s32.totalorder %s235, %s249
      %p251 = scmp.eq.s32.totalorder %s42, 0
      %p252 = por %p250, %p251
      %s254 = sadd.s32 %s253, 1
      %p257 = scmp.eq.s32.totalorder %s36, 1
      %p258 = scmp.ne.s32.totalorder %s253, %s255
      %p259 = scmp.eq.s32.totalorder %s36, 0
      %p260 = por %p258, %p259
      %p261 = scmp.ne.s32.totalorder %s253, %s255
      %p262 = scmp.eq.s32.totalorder %s41, 1
      %p263 = por %p261, %p262
      %p264 = scmp.ne.s32.totalorder %s255, %s256
      %p265 = scmp.eq.s32.totalorder %s41, 0
      %p266 = por %p264, %p265
      %p267 = scmp.ne.s32.totalorder %s255, %s256
      %p268 = scmp.eq.s32.totalorder %s42, 1
      %p269 = por %p267, %p268
      %p271 = scmp.ne.s32.totalorder %s256, %s270
      %p272 = scmp.eq.s32.totalorder %s42, 0
      %p273 = por %p271, %p272
      %s275 = sadd.s32 %s274, 1
      %p278 = scmp.eq.s32.totalorder %s36, 1
      %p279 = scmp.ne.s32.totalorder %s274, %s276
      %p280 = scmp.eq.s32.totalorder %s36, 0
      %p281 = por %p279, %p280
      %p282 = scmp.ne.s32.totalorder %s274, %s276
      %p283 = scmp.eq.s32.totalorder %s41, 1
      %p284 = por %p282, %p283
      %p285 = scmp.ne.s32.totalorder %s276, %s277
      %p286 = scmp.eq.s32.totalorder %s41, 0
      %p287 = por %p285, %p286
      %p288 = scmp.ne.s32.totalorder %s276, %s277
      %p289 = scmp.eq.s32.totalorder %s42, 1
      %p290 = por %p288, %p289
      %p292 = scmp.ne.s32.totalorder %s277, %s291
      %p293 = scmp.eq.s32.totalorder %s42, 0
      %p294 = por %p292, %p293
      %s296 = sadd.s32 %s295, 1
      %p299 = scmp.eq.s32.totalorder %s36, 1
      %p300 = scmp.ne.s32.totalorder %s295, %s297
      %p301 = scmp.eq.s32.totalorder %s36, 0
      %p302 = por %p300, %p301
      %p303 = scmp.ne.s32.totalorder %s295, %s297
      %p304 = scmp.eq.s32.totalorder %s41, 1
      %p305 = por %p303, %p304
      %p306 = scmp.ne.s32.totalorder %s297, %s298
      %p307 = scmp.eq.s32.totalorder %s41, 0
      %p308 = por %p306, %p307
      %p309 = scmp.ne.s32.totalorder %s297, %s298
      %p310 = scmp.eq.s32.totalorder %s42, 1
      %p311 = por %p309, %p310
      %p313 = scmp.ne.s32.totalorder %s298, %s312
      %p314 = scmp.eq.s32.totalorder %s42, 0
      %p315 = por %p313, %p314
      %s317 = sadd.s32 %s316, 1
      %p320 = scmp.eq.s32.totalorder %s36, 1
      %p321 = scmp.ne.s32.totalorder %s316, %s318
      %p322 = scmp.eq.s32.totalorder %s36, 0
      %p323 = por %p321, %p322
      %p324 = scmp.ne.s32.totalorder %s316, %s318
      %p325 = scmp.eq.s32.totalorder %s41, 1
      %p326 = por %p324, %p325
      %p327 = scmp.ne.s32.totalorder %s318, %s319
      %p328 = scmp.eq.s32.totalorder %s41, 0
      %p329 = por %p327, %p328
      %p330 = scmp.ne.s32.totalorder %s318, %s319
      %p331 = scmp.eq.s32.totalorder %s42, 1
      %p332 = por %p330, %p331
      %p334 = scmp.ne.s32.totalorder %s319, %s333
      %p335 = scmp.eq.s32.totalorder %s42, 0
      %p336 = por %p334, %p335
      %s338 = sadd.s32 %s337, 1
      %p341 = scmp.eq.s32.totalorder %s36, 1
      %p342 = scmp.ne.s32.totalorder %s337, %s339
      %p343 = scmp.eq.s32.totalorder %s36, 0
      %p344 = por %p342, %p343
      %p345 = scmp.ne.s32.totalorder %s337, %s339
      %p346 = scmp.eq.s32.totalorder %s41, 1
      %p347 = por %p345, %p346
      %p348 = scmp.ne.s32.totalorder %s339, %s340
      %p349 = scmp.eq.s32.totalorder %s41, 0
      %p350 = por %p348, %p349
      %p351 = scmp.ne.s32.totalorder %s339, %s340
      %p352 = scmp.eq.s32.totalorder %s42, 1
      %p353 = por %p351, %p352
      %p355 = scmp.ne.s32.totalorder %s340, %s354
      %p356 = scmp.eq.s32.totalorder %s42, 0
      %p357 = por %p355, %p356
      %s358 = ssub.s32 %s36, %s43
      %p359 = scmp.eq.s32.totalorder %s358, 0
      %s361 = sadd.s32 %s360, 1
      %s362 = scalar_select %p359, %s360, %s361
      %p365 = pneg %p359
      %p366 = scmp.eq.s32.totalorder %s36, 1
      %p367 = por %p365, %p366
      %p368 = scmp.ne.s32.totalorder %s360, %s363
      %p369 = scmp.eq.s32.totalorder %s36, 0
      %p370 = por %p368, %p369
      %p371 = scmp.ne.s32.totalorder %s360, %s363
      %p372 = scmp.eq.s32.totalorder %s41, 1
      %p373 = por %p371, %p372
      %p374 = scmp.ne.s32.totalorder %s363, %s364
      %p375 = scmp.eq.s32.totalorder %s41, 0
      %p376 = por %p374, %p375
      %p377 = scmp.ne.s32.totalorder %s363, %s364
      %p378 = scmp.eq.s32.totalorder %s42, 1
      %p379 = por %p377, %p378
      %p381 = scmp.ne.s32.totalorder %s364, %s380
      %p382 = scmp.eq.s32.totalorder %s42, 0
      %p383 = por %p381, %p382
      %s384 = ssub.s32 %s36, %s43
      %p385 = scmp.eq.s32.totalorder %s384, 0
      %s387 = sadd.s32 %s386, 1
      %s388 = scalar_select %p385, %s386, %s387
      %p391 = pneg %p385
      %p392 = scmp.eq.s32.totalorder %s36, 1
      %p393 = por %p391, %p392
      %p394 = scmp.ne.s32.totalorder %s386, %s389
      %p395 = scmp.eq.s32.totalorder %s36, 0
      %p396 = por %p394, %p395
      %p397 = scmp.ne.s32.totalorder %s386, %s389
      %p398 = scmp.eq.s32.totalorder %s41, 1
      %p399 = por %p397, %p398
      %p400 = scmp.ne.s32.totalorder %s389, %s390
      %p401 = scmp.eq.s32.totalorder %s41, 0
      %p402 = por %p400, %p401
      %p403 = scmp.ne.s32.totalorder %s389, %s390
      %p404 = scmp.eq.s32.totalorder %s42, 1
      %p405 = por %p403, %p404
      %p407 = scmp.ne.s32.totalorder %s390, %s406
      %p408 = scmp.eq.s32.totalorder %s42, 0
      %p409 = por %p407, %p408
      %p410 = scmp.le.s32.totalorder 1, %s36
      %p411 = scmp.lt.s32.totalorder %s36, 3
      %p412 = pnand %p410, %p411
      %p413 = pneg %p412
      // Predicated region
      $region9: #{tpu_custom_call.1} parent=5 // pred_check
        _
      $region10: #{tpu_custom_call.1} parent=5 // pred_check_branch
        %415 = sbr.rel (%p412) target = $region12
      $region11: #{tpu_custom_call.1} parent=5 // pred_region
        %s416 = ssub.s32 %s36, 1
        // Predicated region
        $region13: #{tpu_custom_call.1} parent=11 // pred_check
          %p417 = pneg %p161
        $region14: #{tpu_custom_call.1} parent=11 // pred_check_branch
          %419 = sbr.rel (%p417) target = $region16
        $region15: #{tpu_custom_call.1} parent=11 // pred_region
          %s421 = ssub.s32 512, 512
          %422 = vsyncadd [#allocation9], %s421
          %s423 = sshll.u32 [#allocation8], 4
          %s424 = int_to_ptr.vmem [resolvable:$true] %s423
          %429 = dma.hbm_to_vmem [thread:$0]  %s4, 512, %s424, [#allocation9], 128, 128, 8
        $region16: #{tpu_custom_call.1} parent=11 // pred_fallthru
          _
        // Predicated region
        $region17: #{tpu_custom_call.1} parent=11 // pred_check
          %p430 = pneg %p182
        $region18: #{tpu_custom_call.1} parent=11 // pred_check_branch
          %432 = sbr.rel (%p430) target = $region20
        $region19: #{tpu_custom_call.1} parent=11 // pred_region
          _
        $region20: #{tpu_custom_call.1} parent=11 // pred_fallthru
          _
        // Predicated region
        $region21: #{tpu_custom_call.1} parent=11 // pred_check
          %p433 = pneg %p203
        $region22: #{tpu_custom_call.1} parent=11 // pred_check_branch
          %435 = sbr.rel (%p433) target = $region24
        $region23: #{tpu_custom_call.1} parent=11 // pred_region
          %s437 = ssub.s32 512, 512
          %438 = vsyncadd [#allocation9], %s437
          %s439 = sshll.u32 [#allocation10], 4
          %s440 = int_to_ptr.vmem [resolvable:$true] %s439
          %445 = dma.hbm_to_vmem [thread:$0]  %s6, 512, %s440, [#allocation9], 128, 128, 8
        $region24: #{tpu_custom_call.1} parent=11 // pred_fallthru
          _
        // Predicated region
        $region25: #{tpu_custom_call.1} parent=11 // pred_check
          %p446 = pneg %p224
        $region26: #{tpu_custom_call.1} parent=11 // pred_check_branch
          %448 = sbr.rel (%p446) target = $region28
        $region27: #{tpu_custom_call.1} parent=11 // pred_region
          _
        $region28: #{tpu_custom_call.1} parent=11 // pred_fallthru
          _
        // Predicated region
        $region29: #{tpu_custom_call.1} parent=11 // pred_check
          %p449 = pneg %p245
        $region30: #{tpu_custom_call.1} parent=11 // pred_check_branch
          %451 = sbr.rel (%p449) target = $region32
        $region31: #{tpu_custom_call.1} parent=11 // pred_region
          %s453 = ssub.s32 512, 512
          %454 = vsyncadd [#allocation12], %s453
          %s455 = sshll.u32 [#allocation11], 4
          %s456 = int_to_ptr.vmem [resolvable:$true] %s455
          %461 = dma.hbm_to_vmem [thread:$0]  %s8, 512, %s456, [#allocation12], 128, 128, 8
        $region32: #{tpu_custom_call.1} parent=11 // pred_fallthru
          _
        // Predicated region
        $region33: #{tpu_custom_call.1} parent=11 // pred_check
          %p462 = pneg %p266
        $region34: #{tpu_custom_call.1} parent=11 // pred_check_branch
          %464 = sbr.rel (%p462) target = $region36
        $region35: #{tpu_custom_call.1} parent=11 // pred_region
          _
        $region36: #{tpu_custom_call.1} parent=11 // pred_fallthru
          _
        // Predicated region
        $region37: #{tpu_custom_call.1} parent=11 // pred_check
          %p465 = pneg %p287
        $region38: #{tpu_custom_call.1} parent=11 // pred_check_branch
          %467 = sbr.rel (%p465) target = $region40
        $region39: #{tpu_custom_call.1} parent=11 // pred_region
          %s469 = ssub.s32 512, 512
          %470 = vsyncadd [#allocation12], %s469
          %s471 = sshll.u32 [#allocation13], 4
          %s472 = int_to_ptr.vmem [resolvable:$true] %s471
          %477 = dma.hbm_to_vmem [thread:$0]  %s10, 512, %s472, [#allocation12], 128, 128, 8
        $region40: #{tpu_custom_call.1} parent=11 // pred_fallthru
          _
        // Predicated region
        $region41: #{tpu_custom_call.1} parent=11 // pred_check
          %p478 = pneg %p308
        $region42: #{tpu_custom_call.1} parent=11 // pred_check_branch
          %480 = sbr.rel (%p478) target = $region44
        $region43: #{tpu_custom_call.1} parent=11 // pred_region
          _
        $region44: #{tpu_custom_call.1} parent=11 // pred_fallthru
          _
        // Predicated region
        $region45: #{tpu_custom_call.1} parent=11 // pred_check
          %p481 = pneg %p329
        $region46: #{tpu_custom_call.1} parent=11 // pred_check_branch
          %483 = sbr.rel (%p481) target = $region48
        $region47: #{tpu_custom_call.1} parent=11 // pred_region
          _
        $region48: #{tpu_custom_call.1} parent=11 // pred_fallthru
          _
        // Predicated region
        $region49: #{tpu_custom_call.1} parent=11 // pred_check
          %p484 = pneg %p350
        $region50: #{tpu_custom_call.1} parent=11 // pred_check_branch
          %486 = sbr.rel (%p484) target = $region52
        $region51: #{tpu_custom_call.1} parent=11 // pred_region
          _
        $region52: #{tpu_custom_call.1} parent=11 // pred_fallthru
          _
      $region12: #{tpu_custom_call.1} parent=5 // pred_fallthru
        _
      %p487 = scmp.lt.s32.totalorder %s36, 2
      // Predicated region
      $region53: #{tpu_custom_call.1} parent=5 // pred_check
        %p488 = pneg %p487
      $region54: #{tpu_custom_call.1} parent=5 // pred_check_branch
        %490 = sbr.rel (%p488) target = $region56
      $region55: #{tpu_custom_call.1} parent=5 // pred_region
        // Predicated region
        $region57: #{tpu_custom_call.1} parent=55 // pred_check
          %p491 = pneg %p56
        $region58: #{tpu_custom_call.1} parent=55 // pred_check_branch
          %493 = sbr.rel (%p491) target = $region60
        $region59: #{tpu_custom_call.1} parent=55 // pred_region
          %s494 = sand.u32 %s46, 1
          %s495 = scalar_lea.sflag [#allocation3], %s494
          %s496 = sand.u32 %s46, 1
          %s497 = smul.addr %s496, 8
          %s498 = scalar_lea.vmem [#allocation2], %s497
          %s500 = ssub.s32 128, 128
          %501 = vsyncadd %s495, %s500
          %s502 = smul.addr %s36, 128
          %s503 = scalar_lea.hbm %s0, %s502
          %s505 = sshll.u32 %s498, 4
          %s506 = int_to_ptr.vmem [resolvable:$true] %s505
          %508 = dma.hbm_to_vmem [thread:$0]  %s503, 128, %s506, %s495
        $region60: #{tpu_custom_call.1} parent=55 // pred_fallthru
          _
        // Predicated region
        $region61: #{tpu_custom_call.1} parent=55 // pred_check
          %p509 = pneg %p82
        $region62: #{tpu_custom_call.1} parent=55 // pred_check_branch
          %511 = sbr.rel (%p509) target = $region64
        $region63: #{tpu_custom_call.1} parent=55 // pred_region
          %s512 = sand.u32 %s36, 1
          %s513 = scalar_lea.sflag [#allocation6], %s512
          %s514 = sand.u32 %s72, 1
          %s515 = smul.addr %s514, 8
          %s516 = scalar_lea.vmem [#allocation5], %s515
          %s518 = ssub.s32 128, 128
          %519 = vsyncadd %s513, %s518
          %s520 = smul.addr %s36, 128
          %s521 = scalar_lea.hbm %s1, %s520
          %s523 = sshll.u32 %s516, 4
          %s524 = int_to_ptr.vmem [resolvable:$true] %s523
          %526 = dma.hbm_to_vmem [thread:$0]  %s521, 128, %s524, %s513
        $region64: #{tpu_custom_call.1} parent=55 // pred_fallthru
          _
        // Predicated region
        $region65: #{tpu_custom_call.1} parent=55 // pred_check
          %p527 = pneg %p108
        $region66: #{tpu_custom_call.1} parent=55 // pred_check_branch
          %529 = sbr.rel (%p527) target = $region68
        $region67: #{tpu_custom_call.1} parent=55 // pred_region
          %s530 = sand.u32 %s36, 1
          %s531 = scalar_lea.sflag [#allocation6], %s530
          %s532 = sand.u32 %s98, 1
          %s533 = smul.addr %s532, 8
          %s534 = scalar_lea.vmem [#allocation7], %s533
          %s536 = ssub.s32 128, 128
          %537 = vsyncadd %s531, %s536
          %s538 = smul.addr %s36, 128
          %s539 = scalar_lea.hbm %s2, %s538
          %s541 = sshll.u32 %s534, 4
          %s542 = int_to_ptr.vmem [resolvable:$true] %s541
          %544 = dma.hbm_to_vmem [thread:$0]  %s539, 128, %s542, %s531
        $region68: #{tpu_custom_call.1} parent=55 // pred_fallthru
          _
        // Predicated region
        $region69: #{tpu_custom_call.1} parent=55 // pred_check
          %p545 = pneg %p134
        $region70: #{tpu_custom_call.1} parent=55 // pred_check_branch
          %547 = sbr.rel (%p545) target = $region72
        $region71: #{tpu_custom_call.1} parent=55 // pred_region
          %p548 = scmp.lt.s32.totalorder %s36, 1
          %s549 = scalar_select %p548, %s36, 1
          %s550 = smul.addr %s549, 2
          %s551 = scalar_lea.vmem %s3, %s550
        $region72: #{tpu_custom_call.1} parent=55 // pred_fallthru
          _
      $region56: #{tpu_custom_call.1} parent=5 // pred_fallthru
        _
      %p552 = scmp.le.s32.totalorder 1, %s36
      %p553 = scmp.lt.s32.totalorder %s36, 3
      %p554 = pnand %p552, %p553
      %p555 = pneg %p554
      // Predicated region
      $region73: #{tpu_custom_call.1} parent=5 // pred_check
        _
      $region74: #{tpu_custom_call.1} parent=5 // pred_check_branch
        %557 = sbr.rel (%p554) target = $region76
      $region75: #{tpu_custom_call.1} parent=5 // pred_region
        %s558 = ssub.s32 %s36, 1
        %s559 = sand.u32 %s49, 1
        %s560 = scalar_lea.sflag [#allocation3], %s559
        %s561 = sand.u32 %s49, 1
        %s562 = smul.addr %s561, 8
        %s563 = scalar_lea.vmem [#allocation2], %s562
        // Predicated region
        $region77: #{tpu_custom_call.1} parent=75 // pred_check
          %p564 = pneg %p62
        $region78: #{tpu_custom_call.1} parent=75 // pred_check_branch
          %566 = sbr.rel (%p564) target = $region80
        $region79: #{tpu_custom_call.1} parent=75 // pred_region
          %567 = dma.done %s560, 128
        $region80: #{tpu_custom_call.1} parent=75 // pred_fallthru
          _
        %s568 = sand.u32 %s41, 1
        %s569 = scalar_lea.sflag [#allocation6], %s568
        %s570 = sand.u32 %s75, 1
        %s571 = smul.addr %s570, 8
        %s572 = scalar_lea.vmem [#allocation5], %s571
        // Predicated region
        $region81: #{tpu_custom_call.1} parent=75 // pred_check
          %p573 = pneg %p88
        $region82: #{tpu_custom_call.1} parent=75 // pred_check_branch
          %575 = sbr.rel (%p573) target = $region84
        $region83: #{tpu_custom_call.1} parent=75 // pred_region
          %576 = dma.done %s569, 128
        $region84: #{tpu_custom_call.1} parent=75 // pred_fallthru
          _
        %s577 = sand.u32 %s41, 1
        %s578 = scalar_lea.sflag [#allocation6], %s577
        %s579 = sand.u32 %s101, 1
        %s580 = smul.addr %s579, 8
        %s581 = scalar_lea.vmem [#allocation7], %s580
        // Predicated region
        $region85: #{tpu_custom_call.1} parent=75 // pred_check
          %p582 = pneg %p114
        $region86: #{tpu_custom_call.1} parent=75 // pred_check_branch
          %584 = sbr.rel (%p582) target = $region88
        $region87: #{tpu_custom_call.1} parent=75 // pred_region
          %585 = dma.done %s578, 128
        $region88: #{tpu_custom_call.1} parent=75 // pred_fallthru
          _
        // Predicated region
        $region89: #{tpu_custom_call.1} parent=75 // pred_check
          %p586 = pneg %p161
        $region90: #{tpu_custom_call.1} parent=75 // pred_check_branch
          %588 = sbr.rel (%p586) target = $region92
        $region91: #{tpu_custom_call.1} parent=75 // pred_region
          %589 = dma.done [#allocation9], 512
        $region92: #{tpu_custom_call.1} parent=75 // pred_fallthru
          _
        // Predicated region
        $region93: #{tpu_custom_call.1} parent=75 // pred_check
          %p590 = pneg %p203
        $region94: #{tpu_custom_call.1} parent=75 // pred_check_branch
          %592 = sbr.rel (%p590) target = $region96
        $region95: #{tpu_custom_call.1} parent=75 // pred_region
          %593 = dma.done [#allocation9], 512
        $region96: #{tpu_custom_call.1} parent=75 // pred_fallthru
          _
        // Predicated region
        $region97: #{tpu_custom_call.1} parent=75 // pred_check
          %p594 = pneg %p245
        $region98: #{tpu_custom_call.1} parent=75 // pred_check_branch
          %596 = sbr.rel (%p594) target = $region100
        $region99: #{tpu_custom_call.1} parent=75 // pred_region
          %597 = dma.done [#allocation12], 512
        $region100: #{tpu_custom_call.1} parent=75 // pred_fallthru
          _
        // Predicated region
        $region101: #{tpu_custom_call.1} parent=75 // pred_check
          %p598 = pneg %p287
        $region102: #{tpu_custom_call.1} parent=75 // pred_check_branch
          %600 = sbr.rel (%p598) target = $region104
        $region103: #{tpu_custom_call.1} parent=75 // pred_region
          %601 = dma.done [#allocation12], 512
        $region104: #{tpu_custom_call.1} parent=75 // pred_fallthru
          _
        %s602 = sand.u32 %s49, 1
        %s603 = scalar_lea.sflag [#allocation3], %s602
        %s604 = sand.u32 %s49, 1
        %s605 = smul.addr %s604, 8
        %s606 = scalar_lea.vmem [#allocation2], %s605
        %p607 = pneg %p62
        %p608 = pneg %p59
        %s609 = sand.u32 %s41, 1
        %s610 = scalar_lea.sflag [#allocation6], %s609
        %s611 = sand.u32 %s75, 1
        %s612 = smul.addr %s611, 8
        %s613 = scalar_lea.vmem [#allocation5], %s612
        %p614 = pneg %p88
        %p615 = pneg %p85
        %s616 = sand.u32 %s41, 1
        %s617 = scalar_lea.sflag [#allocation6], %s616
        %s618 = sand.u32 %s101, 1
        %s619 = smul.addr %s618, 8
        %s620 = scalar_lea.vmem [#allocation7], %s619
        %p621 = pneg %p114
        %p622 = pneg %p111
        %p623 = scmp.lt.s32.totalorder %s41, 1
        %s624 = scalar_select %p623, %s41, 1
        %s625 = smul.addr %s624, 2
        %s626 = scalar_lea.vmem %s3, %s625
        %p627 = pneg %p140
        %p628 = pneg %p137
        %p629 = pneg %p161
        %p630 = pneg %p158
        %p631 = pneg %p182
        %p632 = pneg %p179
        %p633 = pneg %p203
        %p634 = pneg %p200
        %p635 = pneg %p224
        %p636 = pneg %p221
        %p637 = pneg %p245
        %p638 = pneg %p242
        %p639 = pneg %p266
        %p640 = pneg %p263
        %p641 = pneg %p287
        %p642 = pneg %p284
        %p643 = pneg %p308
        %p644 = pneg %p305
        %p645 = pneg %p329
        %p646 = pneg %p326
        %p647 = pneg %p350
        %p648 = pneg %p347
        %p649 = pneg %p376
        %p650 = pneg %p373
        %s651 = sand.u32 %s363, 1
        %s652 = scalar_lea.sflag [#allocation4], %s651
        %s653 = sand.u32 %s363, 1
        %s654 = smul.addr %s653, 8
        %s655 = scalar_lea.vmem [#allocation14], %s654
        %p656 = pneg %p402
        %p657 = pneg %p399
        %s658 = sand.u32 %s389, 1
        %s659 = scalar_lea.sflag [#allocation16], %s658
        %s660 = sand.u32 %s389, 1
        %s661 = smul.addr %s660, 32
        %s662 = scalar_lea.vmem [#allocation15], %s661
        %p663 = scmp.lt.s32.totalorder %s41, 1
        %s664 = scalar_select %p663, %s41, 1
        %s665 = smul.addr %s664, 2
        %s666 = scalar_lea.vmem %s3, %s665
        %v667 = vld [vmem:[%s563] sm:$0xff]
        %v668 = vld [vmem:[%s572] sm:$0xff]
        %v669 = vld [vmem:[%s581] sm:$0xff]
        %v670 = vld [vmem:[#allocation8] sm:$0xff]
        %v671 = vld [vmem:[#allocation8 + $0x8] sm:$0xff]
        %v672 = vld [vmem:[#allocation8 + $0x10] sm:$0xff]
        %v673 = vld [vmem:[#allocation8 + $0x18] sm:$0xff]
        %v674 = vld [vmem:[%s5] sm:$0x1]
        %v676 = vlaneseq
        %v677 = vshrl.u32 %v676, 7
        %v678 = vsub.s32 0, %v677
        %v679 = vrot.slane %v674, %v678
        %vm681 = vcmask 261120
        %v683 = vsel %vm681, %v667, 0
        %685 = vmatprep.subr.mxu0 0.0
        %686 = vmatpush1.msra.mxu0 0.0
        %687 = vmatprep.subr.mxu0 0.0
        %688 = vmatpush1.msra.mxu0 0.0
        %689 = vmatprep.subr.mxu0 0.0
        %690 = vmatpush1.msra.mxu0 0.0
        %691 = vmatprep.subr.mxu0 0.0
        %692 = vmatpush1.msra.mxu0 0.0
        %693 = vmatprep.subr.mxu0 0.0
        %694 = vmatpush1.msra.mxu0 0.0
        %695 = vmatprep.subr.mxu0 0.0
        %696 = vmatpush1.msra.mxu0 0.0
        %697 = vmatprep.subr.mxu0 0.0
        %698 = vmatpush1.msra.mxu0 0.0
        %699 = vmatprep.subr.mxu0 0.0
        %700 = vmatpush1.msra.mxu0 0.0
        %701 = vmatprep.subr.mxu0 0.0
        %702 = vmatpush1.msra.mxu0 0.0
        %703 = vmatprep.subr.mxu0 0.0
        %704 = vmatpush1.msra.mxu0 0.0
        %705 = vmatprep.subr.mxu0 0.0
        %706 = vmatpush1.msra.mxu0 0.0
        %707 = vmatprep.subr.mxu0 0.0
        %708 = vmatpush1.msra.mxu0 0.0
        %709 = vmatprep.subr.mxu0 0.0
        %710 = vmatpush1.msra.mxu0 %v673
        %711 = vmatprep.subr.mxu0 0.0
        %712 = vmatpush1.msra.mxu0 %v672
        %713 = vmatprep.subr.mxu0 0.0
        %714 = vmatpush1.msra.mxu0 %v671
        %715 = vmatprep.subr.mxu0 0.0
        %716 = vmatpush1.msra.mxu0 %v670
        %717 = vmatprep.subr.mxu0 0.0
        %718 = vmatpush2.msra.mxu0 0.0
        %719 = vmatprep.subr.mxu0 0.0
        %720 = vmatpush2.msra.mxu0 0.0
        %721 = vmatprep.subr.mxu0 0.0
        %722 = vmatpush2.msra.mxu0 0.0
        %723 = vmatprep.subr.mxu0 0.0
        %724 = vmatpush2.msra.mxu0 0.0
        %725 = vmatprep.subr.mxu0 0.0
        %726 = vmatpush2.msra.mxu0 0.0
        %727 = vmatprep.subr.mxu0 0.0
        %728 = vmatpush2.msra.mxu0 0.0
        %729 = vmatprep.subr.mxu0 0.0
        %730 = vmatpush2.msra.mxu0 0.0
        %731 = vmatprep.subr.mxu0 0.0
        %732 = vmatpush2.msra.mxu0 0.0
        %733 = vmatprep.subr.mxu0 0.0
        %734 = vmatpush2.msra.mxu0 0.0
        %735 = vmatprep.subr.mxu0 0.0
        %736 = vmatpush2.msra.mxu0 0.0
        %737 = vmatprep.subr.mxu0 0.0
        %738 = vmatpush2.msra.mxu0 0.0
        %739 = vmatprep.subr.mxu0 0.0
        %740 = vmatpush2.msra.mxu0 0.0
        %741 = vmatprep.subr.mxu0 0.0
        %742 = vmatpush2.msra.mxu0 0.0
        %743 = vmatprep.subr.mxu0 0.0
        %744 = vmatpush2.msra.mxu0 0.0
        %745 = vmatprep.subr.mxu0 0.0
        %746 = vmatpush2.msra.mxu0 0.0
        %747 = vmatprep.subr.mxu0 0.0
        %748 = vmatpush2.msra.mxu0 0.0
        %749 = vmatprep.mubr.f32.mxu0 0.0
        %750 = vmatmul.mubr.f32.gmra.mxu0 %v683
        %v751 = vpop.f32.mrf.mxu0
        %v752 = vadd.f32 %v679, %v751
        %v753 = vpop.f32.mrf.mxu0
        %754 = vdwg.mxu0
        %v755 = vld [vmem:[#allocation10] sm:$0xff]
        %v756 = vld [vmem:[#allocation10 + $0x8] sm:$0xff]
        %v757 = vld [vmem:[#allocation10 + $0x10] sm:$0xff]
        %v758 = vld [vmem:[#allocation10 + $0x18] sm:$0xff]
        %v759 = vld [vmem:[%s7] sm:$0x1]
        %v761 = vlaneseq
        %v762 = vshrl.u32 %v761, 7
        %v763 = vsub.s32 0, %v762
        %v764 = vrot.slane %v759, %v763
        %v767 = vsel %vm681, %v668, 0
        %769 = vmatprep.subr.mxu0 0.0
        %770 = vmatpush1.msra.mxu0 0.0
        %771 = vmatprep.subr.mxu0 0.0
        %772 = vmatpush1.msra.mxu0 0.0
        %773 = vmatprep.subr.mxu0 0.0
        %774 = vmatpush1.msra.mxu0 0.0
        %775 = vmatprep.subr.mxu0 0.0
        %776 = vmatpush1.msra.mxu0 0.0
        %777 = vmatprep.subr.mxu0 0.0
        %778 = vmatpush1.msra.mxu0 0.0
        %779 = vmatprep.subr.mxu0 0.0
        %780 = vmatpush1.msra.mxu0 0.0
        %781 = vmatprep.subr.mxu0 0.0
        %782 = vmatpush1.msra.mxu0 0.0
        %783 = vmatprep.subr.mxu0 0.0
        %784 = vmatpush1.msra.mxu0 0.0
        %785 = vmatprep.subr.mxu0 0.0
        %786 = vmatpush1.msra.mxu0 0.0
        %787 = vmatprep.subr.mxu0 0.0
        %788 = vmatpush1.msra.mxu0 0.0
        %789 = vmatprep.subr.mxu0 0.0
        %790 = vmatpush1.msra.mxu0 0.0
        %791 = vmatprep.subr.mxu0 0.0
        %792 = vmatpush1.msra.mxu0 0.0
        %793 = vmatprep.subr.mxu0 0.0
        %794 = vmatpush1.msra.mxu0 %v758
        %795 = vmatprep.subr.mxu0 0.0
        %796 = vmatpush1.msra.mxu0 %v757
        %797 = vmatprep.subr.mxu0 0.0
        %798 = vmatpush1.msra.mxu0 %v756
        %799 = vmatprep.subr.mxu0 0.0
        %800 = vmatpush1.msra.mxu0 %v755
        %801 = vmatprep.subr.mxu0 0.0
        %802 = vmatpush2.msra.mxu0 0.0
        %803 = vmatprep.subr.mxu0 0.0
        %804 = vmatpush2.msra.mxu0 0.0
        %805 = vmatprep.subr.mxu0 0.0
        %806 = vmatpush2.msra.mxu0 0.0
        %807 = vmatprep.subr.mxu0 0.0
        %808 = vmatpush2.msra.mxu0 0.0
        %809 = vmatprep.subr.mxu0 0.0
        %810 = vmatpush2.msra.mxu0 0.0
        %811 = vmatprep.subr.mxu0 0.0
        %812 = vmatpush2.msra.mxu0 0.0
        %813 = vmatprep.subr.mxu0 0.0
        %814 = vmatpush2.msra.mxu0 0.0
        %815 = vmatprep.subr.mxu0 0.0
        %816 = vmatpush2.msra.mxu0 0.0
        %817 = vmatprep.subr.mxu0 0.0
        %818 = vmatpush2.msra.mxu0 0.0
        %819 = vmatprep.subr.mxu0 0.0
        %820 = vmatpush2.msra.mxu0 0.0
        %821 = vmatprep.subr.mxu0 0.0
        %822 = vmatpush2.msra.mxu0 0.0
        %823 = vmatprep.subr.mxu0 0.0
        %824 = vmatpush2.msra.mxu0 0.0
        %825 = vmatprep.subr.mxu0 0.0
        %826 = vmatpush2.msra.mxu0 0.0
        %827 = vmatprep.subr.mxu0 0.0
        %828 = vmatpush2.msra.mxu0 0.0
        %829 = vmatprep.subr.mxu0 0.0
        %830 = vmatpush2.msra.mxu0 0.0
        %831 = vmatprep.subr.mxu0 0.0
        %832 = vmatpush2.msra.mxu0 0.0
        %833 = vmatprep.mubr.f32.mxu0 0.0
        %834 = vmatmul.mubr.f32.gmra.mxu0 %v767
        %v835 = vpop.f32.mrf.mxu0
        %v836 = vadd.f32 %v764, %v835
        %v837 = vpop.f32.mrf.mxu0
        %838 = vdwg.mxu0
        %v839 = vld [vmem:[#allocation11] sm:$0xff]
        %v840 = vld [vmem:[#allocation11 + $0x8] sm:$0xff]
        %v841 = vld [vmem:[#allocation11 + $0x10] sm:$0xff]
        %v842 = vld [vmem:[#allocation11 + $0x18] sm:$0xff]
        %v843 = vld [vmem:[%s9] sm:$0x1]
        %v845 = vlaneseq
        %v846 = vshrl.u32 %v845, 7
        %v847 = vsub.s32 0, %v846
        %v848 = vrot.slane %v843, %v847
        %v851 = vsel %vm681, %v669, 0
        %853 = vmatprep.subr.mxu0 0.0
        %854 = vmatpush1.msra.mxu0 0.0
        %855 = vmatprep.subr.mxu0 0.0
        %856 = vmatpush1.msra.mxu0 0.0
        %857 = vmatprep.subr.mxu0 0.0
        %858 = vmatpush1.msra.mxu0 0.0
        %859 = vmatprep.subr.mxu0 0.0
        %860 = vmatpush1.msra.mxu0 0.0
        %861 = vmatprep.subr.mxu0 0.0
        %862 = vmatpush1.msra.mxu0 0.0
        %863 = vmatprep.subr.mxu0 0.0
        %864 = vmatpush1.msra.mxu0 0.0
        %865 = vmatprep.subr.mxu0 0.0
        %866 = vmatpush1.msra.mxu0 0.0
        %867 = vmatprep.subr.mxu0 0.0
        %868 = vmatpush1.msra.mxu0 0.0
        %869 = vmatprep.subr.mxu0 0.0
        %870 = vmatpush1.msra.mxu0 0.0
        %871 = vmatprep.subr.mxu0 0.0
        %872 = vmatpush1.msra.mxu0 0.0
        %873 = vmatprep.subr.mxu0 0.0
        %874 = vmatpush1.msra.mxu0 0.0
        %875 = vmatprep.subr.mxu0 0.0
        %876 = vmatpush1.msra.mxu0 0.0
        %877 = vmatprep.subr.mxu0 0.0
        %878 = vmatpush1.msra.mxu0 %v842
        %879 = vmatprep.subr.mxu0 0.0
        %880 = vmatpush1.msra.mxu0 %v841
        %881 = vmatprep.subr.mxu0 0.0
        %882 = vmatpush1.msra.mxu0 %v840
        %883 = vmatprep.subr.mxu0 0.0
        %884 = vmatpush1.msra.mxu0 %v839
        %885 = vmatprep.subr.mxu0 0.0
        %886 = vmatpush2.msra.mxu0 0.0
        %887 = vmatprep.subr.mxu0 0.0
        %888 = vmatpush2.msra.mxu0 0.0
        %889 = vmatprep.subr.mxu0 0.0
        %890 = vmatpush2.msra.mxu0 0.0
        %891 = vmatprep.subr.mxu0 0.0
        %892 = vmatpush2.msra.mxu0 0.0
        %893 = vmatprep.subr.mxu0 0.0
        %894 = vmatpush2.msra.mxu0 0.0
        %895 = vmatprep.subr.mxu0 0.0
        %896 = vmatpush2.msra.mxu0 0.0
        %897 = vmatprep.subr.mxu0 0.0
        %898 = vmatpush2.msra.mxu0 0.0
        %899 = vmatprep.subr.mxu0 0.0
        %900 = vmatpush2.msra.mxu0 0.0
        %901 = vmatprep.subr.mxu0 0.0
        %902 = vmatpush2.msra.mxu0 0.0
        %903 = vmatprep.subr.mxu0 0.0
        %904 = vmatpush2.msra.mxu0 0.0
        %905 = vmatprep.subr.mxu0 0.0
        %906 = vmatpush2.msra.mxu0 0.0
        %907 = vmatprep.subr.mxu0 0.0
        %908 = vmatpush2.msra.mxu0 0.0
        %909 = vmatprep.subr.mxu0 0.0
        %910 = vmatpush2.msra.mxu0 0.0
        %911 = vmatprep.subr.mxu0 0.0
        %912 = vmatpush2.msra.mxu0 0.0
        %913 = vmatprep.subr.mxu0 0.0
        %914 = vmatpush2.msra.mxu0 0.0
        %915 = vmatprep.subr.mxu0 0.0
        %916 = vmatpush2.msra.mxu0 0.0
        %917 = vmatprep.mubr.f32.mxu0 0.0
        %918 = vmatmul.mubr.f32.gmra.mxu0 %v851
        %v919 = vpop.f32.mrf.mxu0
        %v920 = vadd.f32 %v848, %v919
        %v921 = vpop.f32.mrf.mxu0
        %922 = vdwg.mxu0
        %924 = vrot.lane.b32.xlu0 %v752, 120
        %v925 = vpop.permute.xlu0 %924
        %926 = vrot.lane.b32.xlu0 %v752, 112
        %v927 = vpop.permute.xlu0 %926
        %928 = vrot.lane.b32.xlu0 %v752, 104
        %v929 = vpop.permute.xlu0 %928
        %931 = vrot.lane.b32.xlu0 %v836, 120
        %v932 = vpop.permute.xlu0 %931
        %933 = vrot.lane.b32.xlu0 %v836, 112
        %v934 = vpop.permute.xlu0 %933
        %935 = vrot.lane.b32.xlu0 %v836, 104
        %v936 = vpop.permute.xlu0 %935
        %938 = vrot.lane.b32.xlu0 %v920, 120
        %v939 = vpop.permute.xlu0 %938
        %941 = vrot.lane.b32.xlu0 %v920, 112
        %v942 = vpop.permute.xlu0 %941
        %944 = vrot.lane.b32.xlu0 %v920, 104
        %v945 = vpop.permute.xlu0 %944
        %vm947 = vcmask 64512
        %v948 = vsel %vm947, %v752, 0
        %v950 = vsel %vm947, %v836, 0
        %952 = vmatprep.subr.mxu0 0.0
        %953 = vmatpush1.xpose.msra.mxu0 0.0
        %954 = vmatprep.subr.mxu0 0.0
        %955 = vmatpush1.xpose.msra.mxu0 0.0
        %956 = vmatprep.subr.mxu0 0.0
        %957 = vmatpush1.xpose.msra.mxu0 0.0
        %958 = vmatprep.subr.mxu0 0.0
        %959 = vmatpush1.xpose.msra.mxu0 0.0
        %960 = vmatprep.subr.mxu0 0.0
        %961 = vmatpush1.xpose.msra.mxu0 0.0
        %962 = vmatprep.subr.mxu0 0.0
        %963 = vmatpush1.xpose.msra.mxu0 0.0
        %964 = vmatprep.subr.mxu0 0.0
        %965 = vmatpush1.xpose.msra.mxu0 0.0
        %966 = vmatprep.subr.mxu0 0.0
        %967 = vmatpush1.xpose.msra.mxu0 0.0
        %968 = vmatprep.subr.mxu0 0.0
        %969 = vmatpush1.xpose.msra.mxu0 0.0
        %970 = vmatprep.subr.mxu0 0.0
        %971 = vmatpush1.xpose.msra.mxu0 0.0
        %972 = vmatprep.subr.mxu0 0.0
        %973 = vmatpush1.xpose.msra.mxu0 0.0
        %974 = vmatprep.subr.mxu0 0.0
        %975 = vmatpush1.xpose.msra.mxu0 0.0
        %976 = vmatprep.subr.mxu0 0.0
        %977 = vmatpush1.xpose.msra.mxu0 0.0
        %978 = vmatprep.subr.mxu0 0.0
        %979 = vmatpush1.xpose.msra.mxu0 0.0
        %980 = vmatprep.subr.mxu0 0.0
        %981 = vmatpush1.xpose.msra.mxu0 0.0
        %982 = vmatprep.subr.mxu0 0.0
        %983 = vmatpush1.xpose.msra.mxu0 %v950
        %984 = vmatprep.subr.mxu0 0.0
        %985 = vmatpush2.xpose.msra.mxu0 0.0
        %986 = vmatprep.subr.mxu0 0.0
        %987 = vmatpush2.xpose.msra.mxu0 0.0
        %988 = vmatprep.subr.mxu0 0.0
        %989 = vmatpush2.xpose.msra.mxu0 0.0
        %990 = vmatprep.subr.mxu0 0.0
        %991 = vmatpush2.xpose.msra.mxu0 0.0
        %992 = vmatprep.subr.mxu0 0.0
        %993 = vmatpush2.xpose.msra.mxu0 0.0
        %994 = vmatprep.subr.mxu0 0.0
        %995 = vmatpush2.xpose.msra.mxu0 0.0
        %996 = vmatprep.subr.mxu0 0.0
        %997 = vmatpush2.xpose.msra.mxu0 0.0
        %998 = vmatprep.subr.mxu0 0.0
        %999 = vmatpush2.xpose.msra.mxu0 0.0
        %1000 = vmatprep.subr.mxu0 0.0
        %1001 = vmatpush2.xpose.msra.mxu0 0.0
        %1002 = vmatprep.subr.mxu0 0.0
        %1003 = vmatpush2.xpose.msra.mxu0 0.0
        %1004 = vmatprep.subr.mxu0 0.0
        %1005 = vmatpush2.xpose.msra.mxu0 0.0
        %1006 = vmatprep.subr.mxu0 0.0
        %1007 = vmatpush2.xpose.msra.mxu0 0.0
        %1008 = vmatprep.subr.mxu0 0.0
        %1009 = vmatpush2.xpose.msra.mxu0 0.0
        %1010 = vmatprep.subr.mxu0 0.0
        %1011 = vmatpush2.xpose.msra.mxu0 0.0
        %1012 = vmatprep.subr.mxu0 0.0
        %1013 = vmatpush2.xpose.msra.mxu0 0.0
        %1014 = vmatprep.subr.mxu0 0.0
        %1015 = vmatpush2.xpose.msra.mxu0 0.0
        %1016 = vmatprep.mubr.f32.mxu0 0.0
        %1017 = vmatmul.mubr.f32.gmra.mxu0 %v948
        %v1018 = vpop.f32.mrf.mxu0
        %v1019 = vadd.f32 0.0, %v1018
        %v1020 = vpop.f32.mrf.mxu0
        %1021 = vdwg.mxu0
        %v1022 = vsel %vm947, %v925, 0
        %v1024 = vsel %vm947, %v932, 0
        %1026 = vmatprep.subr.mxu0 0.0
        %1027 = vmatpush1.xpose.msra.mxu0 0.0
        %1028 = vmatprep.subr.mxu0 0.0
        %1029 = vmatpush1.xpose.msra.mxu0 0.0
        %1030 = vmatprep.subr.mxu0 0.0
        %1031 = vmatpush1.xpose.msra.mxu0 0.0
        %1032 = vmatprep.subr.mxu0 0.0
        %1033 = vmatpush1.xpose.msra.mxu0 0.0
        %1034 = vmatprep.subr.mxu0 0.0
        %1035 = vmatpush1.xpose.msra.mxu0 0.0
        %1036 = vmatprep.subr.mxu0 0.0
        %1037 = vmatpush1.xpose.msra.mxu0 0.0
        %1038 = vmatprep.subr.mxu0 0.0
        %1039 = vmatpush1.xpose.msra.mxu0 0.0
        %1040 = vmatprep.subr.mxu0 0.0
        %1041 = vmatpush1.xpose.msra.mxu0 0.0
        %1042 = vmatprep.subr.mxu0 0.0
        %1043 = vmatpush1.xpose.msra.mxu0 0.0
        %1044 = vmatprep.subr.mxu0 0.0
        %1045 = vmatpush1.xpose.msra.mxu0 0.0
        %1046 = vmatprep.subr.mxu0 0.0
        %1047 = vmatpush1.xpose.msra.mxu0 0.0
        %1048 = vmatprep.subr.mxu0 0.0
        %1049 = vmatpush1.xpose.msra.mxu0 0.0
        %1050 = vmatprep.subr.mxu0 0.0
        %1051 = vmatpush1.xpose.msra.mxu0 0.0
        %1052 = vmatprep.subr.mxu0 0.0
        %1053 = vmatpush1.xpose.msra.mxu0 0.0
        %1054 = vmatprep.subr.mxu0 0.0
        %1055 = vmatpush1.xpose.msra.mxu0 0.0
        %1056 = vmatprep.subr.mxu0 0.0
        %1057 = vmatpush1.xpose.msra.mxu0 %v1024
        %1058 = vmatprep.subr.mxu0 0.0
        %1059 = vmatpush2.xpose.msra.mxu0 0.0
        %1060 = vmatprep.subr.mxu0 0.0
        %1061 = vmatpush2.xpose.msra.mxu0 0.0
        %1062 = vmatprep.subr.mxu0 0.0
        %1063 = vmatpush2.xpose.msra.mxu0 0.0
        %1064 = vmatprep.subr.mxu0 0.0
        %1065 = vmatpush2.xpose.msra.mxu0 0.0
        %1066 = vmatprep.subr.mxu0 0.0
        %1067 = vmatpush2.xpose.msra.mxu0 0.0
        %1068 = vmatprep.subr.mxu0 0.0
        %1069 = vmatpush2.xpose.msra.mxu0 0.0
        %1070 = vmatprep.subr.mxu0 0.0
        %1071 = vmatpush2.xpose.msra.mxu0 0.0
        %1072 = vmatprep.subr.mxu0 0.0
        %1073 = vmatpush2.xpose.msra.mxu0 0.0
        %1074 = vmatprep.subr.mxu0 0.0
        %1075 = vmatpush2.xpose.msra.mxu0 0.0
        %1076 = vmatprep.subr.mxu0 0.0
        %1077 = vmatpush2.xpose.msra.mxu0 0.0
        %1078 = vmatprep.subr.mxu0 0.0
        %1079 = vmatpush2.xpose.msra.mxu0 0.0
        %1080 = vmatprep.subr.mxu0 0.0
        %1081 = vmatpush2.xpose.msra.mxu0 0.0
        %1082 = vmatprep.subr.mxu0 0.0
        %1083 = vmatpush2.xpose.msra.mxu0 0.0
        %1084 = vmatprep.subr.mxu0 0.0
        %1085 = vmatpush2.xpose.msra.mxu0 0.0
        %1086 = vmatprep.subr.mxu0 0.0
        %1087 = vmatpush2.xpose.msra.mxu0 0.0
        %1088 = vmatprep.subr.mxu0 0.0
        %1089 = vmatpush2.xpose.msra.mxu0 0.0
        %1090 = vmatprep.mubr.f32.mxu0 0.0
        %1091 = vmatmul.mubr.f32.gmra.mxu0 %v1022
        %v1092 = vpop.f32.mrf.mxu0
        %v1093 = vadd.f32 0.0, %v1092
        %v1094 = vpop.f32.mrf.mxu0
        %1095 = vdwg.mxu0
        %v1096 = vsel %vm947, %v927, 0
        %v1098 = vsel %vm947, %v934, 0
        %1100 = vmatprep.subr.mxu0 0.0
        %1101 = vmatpush1.xpose.msra.mxu0 0.0
        %1102 = vmatprep.subr.mxu0 0.0
        %1103 = vmatpush1.xpose.msra.mxu0 0.0
        %1104 = vmatprep.subr.mxu0 0.0
        %1105 = vmatpush1.xpose.msra.mxu0 0.0
        %1106 = vmatprep.subr.mxu0 0.0
        %1107 = vmatpush1.xpose.msra.mxu0 0.0
        %1108 = vmatprep.subr.mxu0 0.0
        %1109 = vmatpush1.xpose.msra.mxu0 0.0
        %1110 = vmatprep.subr.mxu0 0.0
        %1111 = vmatpush1.xpose.msra.mxu0 0.0
        %1112 = vmatprep.subr.mxu0 0.0
        %1113 = vmatpush1.xpose.msra.mxu0 0.0
        %1114 = vmatprep.subr.mxu0 0.0
        %1115 = vmatpush1.xpose.msra.mxu0 0.0
        %1116 = vmatprep.subr.mxu0 0.0
        %1117 = vmatpush1.xpose.msra.mxu0 0.0
        %1118 = vmatprep.subr.mxu0 0.0
        %1119 = vmatpush1.xpose.msra.mxu0 0.0
        %1120 = vmatprep.subr.mxu0 0.0
        %1121 = vmatpush1.xpose.msra.mxu0 0.0
        %1122 = vmatprep.subr.mxu0 0.0
        %1123 = vmatpush1.xpose.msra.mxu0 0.0
        %1124 = vmatprep.subr.mxu0 0.0
        %1125 = vmatpush1.xpose.msra.mxu0 0.0
        %1126 = vmatprep.subr.mxu0 0.0
        %1127 = vmatpush1.xpose.msra.mxu0 0.0
        %1128 = vmatprep.subr.mxu0 0.0
        %1129 = vmatpush1.xpose.msra.mxu0 0.0
        %1130 = vmatprep.subr.mxu0 0.0
        %1131 = vmatpush1.xpose.msra.mxu0 %v1098
        %1132 = vmatprep.subr.mxu0 0.0
        %1133 = vmatpush2.xpose.msra.mxu0 0.0
        %1134 = vmatprep.subr.mxu0 0.0
        %1135 = vmatpush2.xpose.msra.mxu0 0.0
        %1136 = vmatprep.subr.mxu0 0.0
        %1137 = vmatpush2.xpose.msra.mxu0 0.0
        %1138 = vmatprep.subr.mxu0 0.0
        %1139 = vmatpush2.xpose.msra.mxu0 0.0
        %1140 = vmatprep.subr.mxu0 0.0
        %1141 = vmatpush2.xpose.msra.mxu0 0.0
        %1142 = vmatprep.subr.mxu0 0.0
        %1143 = vmatpush2.xpose.msra.mxu0 0.0
        %1144 = vmatprep.subr.mxu0 0.0
        %1145 = vmatpush2.xpose.msra.mxu0 0.0
        %1146 = vmatprep.subr.mxu0 0.0
        %1147 = vmatpush2.xpose.msra.mxu0 0.0
        %1148 = vmatprep.subr.mxu0 0.0
        %1149 = vmatpush2.xpose.msra.mxu0 0.0
        %1150 = vmatprep.subr.mxu0 0.0
        %1151 = vmatpush2.xpose.msra.mxu0 0.0
        %1152 = vmatprep.subr.mxu0 0.0
        %1153 = vmatpush2.xpose.msra.mxu0 0.0
        %1154 = vmatprep.subr.mxu0 0.0
        %1155 = vmatpush2.xpose.msra.mxu0 0.0
        %1156 = vmatprep.subr.mxu0 0.0
        %1157 = vmatpush2.xpose.msra.mxu0 0.0
        %1158 = vmatprep.subr.mxu0 0.0
        %1159 = vmatpush2.xpose.msra.mxu0 0.0
        %1160 = vmatprep.subr.mxu0 0.0
        %1161 = vmatpush2.xpose.msra.mxu0 0.0
        %1162 = vmatprep.subr.mxu0 0.0
        %1163 = vmatpush2.xpose.msra.mxu0 0.0
        %1164 = vmatprep.mubr.f32.mxu0 0.0
        %1165 = vmatmul.mubr.f32.gmra.mxu0 %v1096
        %v1166 = vpop.f32.mrf.mxu0
        %v1167 = vadd.f32 0.0, %v1166
        %v1168 = vpop.f32.mrf.mxu0
        %1169 = vdwg.mxu0
        %v1170 = vsel %vm947, %v929, 0
        %v1172 = vsel %vm947, %v936, 0
        %1174 = vmatprep.subr.mxu0 0.0
        %1175 = vmatpush1.xpose.msra.mxu0 0.0
        %1176 = vmatprep.subr.mxu0 0.0
        %1177 = vmatpush1.xpose.msra.mxu0 0.0
        %1178 = vmatprep.subr.mxu0 0.0
        %1179 = vmatpush1.xpose.msra.mxu0 0.0
        %1180 = vmatprep.subr.mxu0 0.0
        %1181 = vmatpush1.xpose.msra.mxu0 0.0
        %1182 = vmatprep.subr.mxu0 0.0
        %1183 = vmatpush1.xpose.msra.mxu0 0.0
        %1184 = vmatprep.subr.mxu0 0.0
        %1185 = vmatpush1.xpose.msra.mxu0 0.0
        %1186 = vmatprep.subr.mxu0 0.0
        %1187 = vmatpush1.xpose.msra.mxu0 0.0
        %1188 = vmatprep.subr.mxu0 0.0
        %1189 = vmatpush1.xpose.msra.mxu0 0.0
        %1190 = vmatprep.subr.mxu0 0.0
        %1191 = vmatpush1.xpose.msra.mxu0 0.0
        %1192 = vmatprep.subr.mxu0 0.0
        %1193 = vmatpush1.xpose.msra.mxu0 0.0
        %1194 = vmatprep.subr.mxu0 0.0
        %1195 = vmatpush1.xpose.msra.mxu0 0.0
        %1196 = vmatprep.subr.mxu0 0.0
        %1197 = vmatpush1.xpose.msra.mxu0 0.0
        %1198 = vmatprep.subr.mxu0 0.0
        %1199 = vmatpush1.xpose.msra.mxu0 0.0
        %1200 = vmatprep.subr.mxu0 0.0
        %1201 = vmatpush1.xpose.msra.mxu0 0.0
        %1202 = vmatprep.subr.mxu0 0.0
        %1203 = vmatpush1.xpose.msra.mxu0 0.0
        %1204 = vmatprep.subr.mxu0 0.0
        %1205 = vmatpush1.xpose.msra.mxu0 %v1172
        %1206 = vmatprep.subr.mxu0 0.0
        %1207 = vmatpush2.xpose.msra.mxu0 0.0
        %1208 = vmatprep.subr.mxu0 0.0
        %1209 = vmatpush2.xpose.msra.mxu0 0.0
        %1210 = vmatprep.subr.mxu0 0.0
        %1211 = vmatpush2.xpose.msra.mxu0 0.0
        %1212 = vmatprep.subr.mxu0 0.0
        %1213 = vmatpush2.xpose.msra.mxu0 0.0
        %1214 = vmatprep.subr.mxu0 0.0
        %1215 = vmatpush2.xpose.msra.mxu0 0.0
        %1216 = vmatprep.subr.mxu0 0.0
        %1217 = vmatpush2.xpose.msra.mxu0 0.0
        %1218 = vmatprep.subr.mxu0 0.0
        %1219 = vmatpush2.xpose.msra.mxu0 0.0
        %1220 = vmatprep.subr.mxu0 0.0
        %1221 = vmatpush2.xpose.msra.mxu0 0.0
        %1222 = vmatprep.subr.mxu0 0.0
        %1223 = vmatpush2.xpose.msra.mxu0 0.0
        %1224 = vmatprep.subr.mxu0 0.0
        %1225 = vmatpush2.xpose.msra.mxu0 0.0
        %1226 = vmatprep.subr.mxu0 0.0
        %1227 = vmatpush2.xpose.msra.mxu0 0.0
        %1228 = vmatprep.subr.mxu0 0.0
        %1229 = vmatpush2.xpose.msra.mxu0 0.0
        %1230 = vmatprep.subr.mxu0 0.0
        %1231 = vmatpush2.xpose.msra.mxu0 0.0
        %1232 = vmatprep.subr.mxu0 0.0
        %1233 = vmatpush2.xpose.msra.mxu0 0.0
        %1234 = vmatprep.subr.mxu0 0.0
        %1235 = vmatpush2.xpose.msra.mxu0 0.0
        %1236 = vmatprep.subr.mxu0 0.0
        %1237 = vmatpush2.xpose.msra.mxu0 0.0
        %1238 = vmatprep.mubr.f32.mxu0 0.0
        %1239 = vmatmul.mubr.f32.gmra.mxu0 %v1170
        %v1240 = vpop.f32.mrf.mxu0
        %v1241 = vadd.f32 0.0, %v1240
        %v1242 = vpop.f32.mrf.mxu0
        %1243 = vdwg.mxu0
        %v1244 = vmul.f32 %v1019, 0.35355338
        %v1245 = vmul.f32 %v1093, 0.35355338
        %v1246 = vmul.f32 %v1167, 0.35355338
        %v1247 = vmul.f32 %v1241, 0.35355338
        %v1248 = vld [vmem:[%s666] sm:$0x3]
        %v1249 = vunpack.c.0.s8 %v1248
        %vm1250 = vcmp.ne.s32.totalorder %v1249, 0
        %v1251 = vsel %vm1250, 1, 0
        %vm1252 = vcmp.eq.s32.totalorder %v1251, 1
        %v1253 = vsel %vm1252, -1e+09, %v1244
        %v1254 = vsel %vm1252, -1e+09, %v1245
        %v1255 = vsel %vm1252, -1e+09, %v1246
        %v1256 = vsel %vm1252, -1e+09, %v1247
        %v1257 = vsel %vm947, %v1253, -inf
        %1258 = vmax.xlane.f32.xlu0 %v1257
        %v1259 = vpop.xlane.xlu0 %1258
        %v1260 = vsel %vm947, %v1254, -inf
        %1261 = vmax.xlane.f32.xlu0 %v1260
        %v1262 = vpop.xlane.xlu0 %1261
        %v1263 = vsel %vm947, %v1255, -inf
        %1264 = vmax.xlane.f32.xlu0 %v1263
        %v1265 = vpop.xlane.xlu0 %1264
        %v1266 = vsel %vm947, %v1256, -inf
        %1267 = vmax.xlane.f32.xlu0 %v1266
        %v1268 = vpop.xlane.xlu0 %1267
        %v1269 = vsub.f32 %v1253, %v1259
        %v1270 = vsub.f32 %v1254, %v1262
        %v1271 = vsub.f32 %v1255, %v1265
        %v1272 = vsub.f32 %v1256, %v1268
        %v1273 = vmul.f32 %v1269, 1.442695
        %v1274 = vpow.pop %v1273
        %v1275 = vmul.f32 %v1270, 1.442695
        %v1276 = vpow.pop %v1275
        %v1277 = vmul.f32 %v1271, 1.442695
        %v1278 = vpow.pop %v1277
        %v1279 = vmul.f32 %v1272, 1.442695
        %v1280 = vpow.pop %v1279
        %v1281 = vsel %vm947, %v1274, 0.0
        %1282 = vadd.xlane.f32.xlu0 %v1281
        %v1283 = vpop.xlane.xlu0 %1282
        %v1284 = vsel %vm947, %v1276, 0.0
        %1285 = vadd.xlane.f32.xlu0 %v1284
        %v1286 = vpop.xlane.xlu0 %1285
        %v1287 = vsel %vm947, %v1278, 0.0
        %1288 = vadd.xlane.f32.xlu0 %v1287
        %v1289 = vpop.xlane.xlu0 %1288
        %v1290 = vsel %vm947, %v1280, 0.0
        %1291 = vadd.xlane.f32.xlu0 %v1290
        %v1292 = vpop.xlane.xlu0 %1291
        %v1293 = vrcp.pop %v1283
        %v1294 = vmul.f32 %v1274, %v1293
        %v1295 = vrcp.pop %v1286
        %v1296 = vmul.f32 %v1276, %v1295
        %v1297 = vrcp.pop %v1289
        %v1298 = vmul.f32 %v1278, %v1297
        %v1299 = vrcp.pop %v1292
        %v1300 = vmul.f32 %v1280, %v1299
        %1301 = vst.msk [vmem:[%s662] sm:$0xff] %vm947, %v1294
        %1302 = vst.msk [vmem:[%s662 + $0x8] sm:$0xff] %vm947, %v1296
        %1303 = vst.msk [vmem:[%s662 + $0x10] sm:$0xff] %vm947, %v1298
        %1304 = vst.msk [vmem:[%s662 + $0x18] sm:$0xff] %vm947, %v1300
        %v1306 = vsel %vm947, %v1294, 0
        %1308 = vmatprep.subr.mxu0 0.0
        %1309 = vmatpush1.msra.mxu0 0.0
        %1310 = vmatprep.subr.mxu0 0.0
        %1311 = vmatpush1.msra.mxu0 0.0
        %1312 = vmatprep.subr.mxu0 0.0
        %1313 = vmatpush1.msra.mxu0 0.0
        %1314 = vmatprep.subr.mxu0 0.0
        %1315 = vmatpush1.msra.mxu0 0.0
        %1316 = vmatprep.subr.mxu0 0.0
        %1317 = vmatpush1.msra.mxu0 0.0
        %1318 = vmatprep.subr.mxu0 0.0
        %1319 = vmatpush1.msra.mxu0 0.0
        %1320 = vmatprep.subr.mxu0 0.0
        %1321 = vmatpush1.msra.mxu0 0.0
        %1322 = vmatprep.subr.mxu0 0.0
        %1323 = vmatpush1.msra.mxu0 0.0
        %1324 = vmatprep.subr.mxu0 0.0
        %1325 = vmatpush1.msra.mxu0 0.0
        %1326 = vmatprep.subr.mxu0 0.0
        %1327 = vmatpush1.msra.mxu0 0.0
        %1328 = vmatprep.subr.mxu0 0.0
        %1329 = vmatpush1.msra.mxu0 0.0
        %1330 = vmatprep.subr.mxu0 0.0
        %1331 = vmatpush1.msra.mxu0 0.0
        %1332 = vmatprep.subr.mxu0 0.0
        %1333 = vmatpush1.msra.mxu0 0.0
        %1334 = vmatprep.subr.mxu0 0.0
        %1335 = vmatpush1.msra.mxu0 0.0
        %1336 = vmatprep.subr.mxu0 0.0
        %1337 = vmatpush1.msra.mxu0 0.0
        %1338 = vmatprep.subr.mxu0 0.0
        %1339 = vmatpush1.msra.mxu0 %v920
        %1340 = vmatprep.subr.mxu0 0.0
        %1341 = vmatpush2.msra.mxu0 0.0
        %1342 = vmatprep.subr.mxu0 0.0
        %1343 = vmatpush2.msra.mxu0 0.0
        %1344 = vmatprep.subr.mxu0 0.0
        %1345 = vmatpush2.msra.mxu0 0.0
        %1346 = vmatprep.subr.mxu0 0.0
        %1347 = vmatpush2.msra.mxu0 0.0
        %1348 = vmatprep.subr.mxu0 0.0
        %1349 = vmatpush2.msra.mxu0 0.0
        %1350 = vmatprep.subr.mxu0 0.0
        %1351 = vmatpush2.msra.mxu0 0.0
        %1352 = vmatprep.subr.mxu0 0.0
        %1353 = vmatpush2.msra.mxu0 0.0
        %1354 = vmatprep.subr.mxu0 0.0
        %1355 = vmatpush2.msra.mxu0 0.0
        %1356 = vmatprep.subr.mxu0 0.0
        %1357 = vmatpush2.msra.mxu0 0.0
        %1358 = vmatprep.subr.mxu0 0.0
        %1359 = vmatpush2.msra.mxu0 0.0
        %1360 = vmatprep.subr.mxu0 0.0
        %1361 = vmatpush2.msra.mxu0 0.0
        %1362 = vmatprep.subr.mxu0 0.0
        %1363 = vmatpush2.msra.mxu0 0.0
        %1364 = vmatprep.subr.mxu0 0.0
        %1365 = vmatpush2.msra.mxu0 0.0
        %1366 = vmatprep.subr.mxu0 0.0
        %1367 = vmatpush2.msra.mxu0 0.0
        %1368 = vmatprep.subr.mxu0 0.0
        %1369 = vmatpush2.msra.mxu0 0.0
        %1370 = vmatprep.subr.mxu0 0.0
        %1371 = vmatpush2.msra.mxu0 0.0
        %1372 = vmatprep.mubr.f32.mxu0 0.0
        %1373 = vmatmul.mubr.f32.gmra.mxu0 %v1306
        %v1374 = vpop.f32.mrf.mxu0
        %v1375 = vadd.f32 0.0, %v1374
        %v1376 = vpop.f32.mrf.mxu0
        %1377 = vdwg.mxu0
        %v1379 = vsel %vm947, %v1296, 0
        %1381 = vmatprep.subr.mxu0 0.0
        %1382 = vmatpush1.msra.mxu0 0.0
        %1383 = vmatprep.subr.mxu0 0.0
        %1384 = vmatpush1.msra.mxu0 0.0
        %1385 = vmatprep.subr.mxu0 0.0
        %1386 = vmatpush1.msra.mxu0 0.0
        %1387 = vmatprep.subr.mxu0 0.0
        %1388 = vmatpush1.msra.mxu0 0.0
        %1389 = vmatprep.subr.mxu0 0.0
        %1390 = vmatpush1.msra.mxu0 0.0
        %1391 = vmatprep.subr.mxu0 0.0
        %1392 = vmatpush1.msra.mxu0 0.0
        %1393 = vmatprep.subr.mxu0 0.0
        %1394 = vmatpush1.msra.mxu0 0.0
        %1395 = vmatprep.subr.mxu0 0.0
        %1396 = vmatpush1.msra.mxu0 0.0
        %1397 = vmatprep.subr.mxu0 0.0
        %1398 = vmatpush1.msra.mxu0 0.0
        %1399 = vmatprep.subr.mxu0 0.0
        %1400 = vmatpush1.msra.mxu0 0.0
        %1401 = vmatprep.subr.mxu0 0.0
        %1402 = vmatpush1.msra.mxu0 0.0
        %1403 = vmatprep.subr.mxu0 0.0
        %1404 = vmatpush1.msra.mxu0 0.0
        %1405 = vmatprep.subr.mxu0 0.0
        %1406 = vmatpush1.msra.mxu0 0.0
        %1407 = vmatprep.subr.mxu0 0.0
        %1408 = vmatpush1.msra.mxu0 0.0
        %1409 = vmatprep.subr.mxu0 0.0
        %1410 = vmatpush1.msra.mxu0 0.0
        %1411 = vmatprep.subr.mxu0 0.0
        %1412 = vmatpush1.msra.mxu0 %v939
        %1413 = vmatprep.subr.mxu0 0.0
        %1414 = vmatpush2.msra.mxu0 0.0
        %1415 = vmatprep.subr.mxu0 0.0
        %1416 = vmatpush2.msra.mxu0 0.0
        %1417 = vmatprep.subr.mxu0 0.0
        %1418 = vmatpush2.msra.mxu0 0.0
        %1419 = vmatprep.subr.mxu0 0.0
        %1420 = vmatpush2.msra.mxu0 0.0
        %1421 = vmatprep.subr.mxu0 0.0
        %1422 = vmatpush2.msra.mxu0 0.0
        %1423 = vmatprep.subr.mxu0 0.0
        %1424 = vmatpush2.msra.mxu0 0.0
        %1425 = vmatprep.subr.mxu0 0.0
        %1426 = vmatpush2.msra.mxu0 0.0
        %1427 = vmatprep.subr.mxu0 0.0
        %1428 = vmatpush2.msra.mxu0 0.0
        %1429 = vmatprep.subr.mxu0 0.0
        %1430 = vmatpush2.msra.mxu0 0.0
        %1431 = vmatprep.subr.mxu0 0.0
        %1432 = vmatpush2.msra.mxu0 0.0
        %1433 = vmatprep.subr.mxu0 0.0
        %1434 = vmatpush2.msra.mxu0 0.0
        %1435 = vmatprep.subr.mxu0 0.0
        %1436 = vmatpush2.msra.mxu0 0.0
        %1437 = vmatprep.subr.mxu0 0.0
        %1438 = vmatpush2.msra.mxu0 0.0
        %1439 = vmatprep.subr.mxu0 0.0
        %1440 = vmatpush2.msra.mxu0 0.0
        %1441 = vmatprep.subr.mxu0 0.0
        %1442 = vmatpush2.msra.mxu0 0.0
        %1443 = vmatprep.subr.mxu0 0.0
        %1444 = vmatpush2.msra.mxu0 0.0
        %1445 = vmatprep.mubr.f32.mxu0 0.0
        %1446 = vmatmul.mubr.f32.gmra.mxu0 %v1379
        %v1447 = vpop.f32.mrf.mxu0
        %v1448 = vadd.f32 0.0, %v1447
        %v1449 = vpop.f32.mrf.mxu0
        %1450 = vdwg.mxu0
        %v1452 = vsel %vm947, %v1298, 0
        %1454 = vmatprep.subr.mxu0 0.0
        %1455 = vmatpush1.msra.mxu0 0.0
        %1456 = vmatprep.subr.mxu0 0.0
        %1457 = vmatpush1.msra.mxu0 0.0
        %1458 = vmatprep.subr.mxu0 0.0
        %1459 = vmatpush1.msra.mxu0 0.0
        %1460 = vmatprep.subr.mxu0 0.0
        %1461 = vmatpush1.msra.mxu0 0.0
        %1462 = vmatprep.subr.mxu0 0.0
        %1463 = vmatpush1.msra.mxu0 0.0
        %1464 = vmatprep.subr.mxu0 0.0
        %1465 = vmatpush1.msra.mxu0 0.0
        %1466 = vmatprep.subr.mxu0 0.0
        %1467 = vmatpush1.msra.mxu0 0.0
        %1468 = vmatprep.subr.mxu0 0.0
        %1469 = vmatpush1.msra.mxu0 0.0
        %1470 = vmatprep.subr.mxu0 0.0
        %1471 = vmatpush1.msra.mxu0 0.0
        %1472 = vmatprep.subr.mxu0 0.0
        %1473 = vmatpush1.msra.mxu0 0.0
        %1474 = vmatprep.subr.mxu0 0.0
        %1475 = vmatpush1.msra.mxu0 0.0
        %1476 = vmatprep.subr.mxu0 0.0
        %1477 = vmatpush1.msra.mxu0 0.0
        %1478 = vmatprep.subr.mxu0 0.0
        %1479 = vmatpush1.msra.mxu0 0.0
        %1480 = vmatprep.subr.mxu0 0.0
        %1481 = vmatpush1.msra.mxu0 0.0
        %1482 = vmatprep.subr.mxu0 0.0
        %1483 = vmatpush1.msra.mxu0 0.0
        %1484 = vmatprep.subr.mxu0 0.0
        %1485 = vmatpush1.msra.mxu0 %v942
        %1486 = vmatprep.subr.mxu0 0.0
        %1487 = vmatpush2.msra.mxu0 0.0
        %1488 = vmatprep.subr.mxu0 0.0
        %1489 = vmatpush2.msra.mxu0 0.0
        %1490 = vmatprep.subr.mxu0 0.0
        %1491 = vmatpush2.msra.mxu0 0.0
        %1492 = vmatprep.subr.mxu0 0.0
        %1493 = vmatpush2.msra.mxu0 0.0
        %1494 = vmatprep.subr.mxu0 0.0
        %1495 = vmatpush2.msra.mxu0 0.0
        %1496 = vmatprep.subr.mxu0 0.0
        %1497 = vmatpush2.msra.mxu0 0.0
        %1498 = vmatprep.subr.mxu0 0.0
        %1499 = vmatpush2.msra.mxu0 0.0
        %1500 = vmatprep.subr.mxu0 0.0
        %1501 = vmatpush2.msra.mxu0 0.0
        %1502 = vmatprep.subr.mxu0 0.0
        %1503 = vmatpush2.msra.mxu0 0.0
        %1504 = vmatprep.subr.mxu0 0.0
        %1505 = vmatpush2.msra.mxu0 0.0
        %1506 = vmatprep.subr.mxu0 0.0
        %1507 = vmatpush2.msra.mxu0 0.0
        %1508 = vmatprep.subr.mxu0 0.0
        %1509 = vmatpush2.msra.mxu0 0.0
        %1510 = vmatprep.subr.mxu0 0.0
        %1511 = vmatpush2.msra.mxu0 0.0
        %1512 = vmatprep.subr.mxu0 0.0
        %1513 = vmatpush2.msra.mxu0 0.0
        %1514 = vmatprep.subr.mxu0 0.0
        %1515 = vmatpush2.msra.mxu0 0.0
        %1516 = vmatprep.subr.mxu0 0.0
        %1517 = vmatpush2.msra.mxu0 0.0
        %1518 = vmatprep.mubr.f32.mxu0 0.0
        %1519 = vmatmul.mubr.f32.gmra.mxu0 %v1452
        %v1520 = vpop.f32.mrf.mxu0
        %v1521 = vadd.f32 0.0, %v1520
        %v1522 = vpop.f32.mrf.mxu0
        %1523 = vdwg.mxu0
        %v1525 = vsel %vm947, %v1300, 0
        %1527 = vmatprep.subr.mxu0 0.0
        %1528 = vmatpush1.msra.mxu0 0.0
        %1529 = vmatprep.subr.mxu0 0.0
        %1530 = vmatpush1.msra.mxu0 0.0
        %1531 = vmatprep.subr.mxu0 0.0
        %1532 = vmatpush1.msra.mxu0 0.0
        %1533 = vmatprep.subr.mxu0 0.0
        %1534 = vmatpush1.msra.mxu0 0.0
        %1535 = vmatprep.subr.mxu0 0.0
        %1536 = vmatpush1.msra.mxu0 0.0
        %1537 = vmatprep.subr.mxu0 0.0
        %1538 = vmatpush1.msra.mxu0 0.0
        %1539 = vmatprep.subr.mxu0 0.0
        %1540 = vmatpush1.msra.mxu0 0.0
        %1541 = vmatprep.subr.mxu0 0.0
        %1542 = vmatpush1.msra.mxu0 0.0
        %1543 = vmatprep.subr.mxu0 0.0
        %1544 = vmatpush1.msra.mxu0 0.0
        %1545 = vmatprep.subr.mxu0 0.0
        %1546 = vmatpush1.msra.mxu0 0.0
        %1547 = vmatprep.subr.mxu0 0.0
        %1548 = vmatpush1.msra.mxu0 0.0
        %1549 = vmatprep.subr.mxu0 0.0
        %1550 = vmatpush1.msra.mxu0 0.0
        %1551 = vmatprep.subr.mxu0 0.0
        %1552 = vmatpush1.msra.mxu0 0.0
        %1553 = vmatprep.subr.mxu0 0.0
        %1554 = vmatpush1.msra.mxu0 0.0
        %1555 = vmatprep.subr.mxu0 0.0
        %1556 = vmatpush1.msra.mxu0 0.0
        %1557 = vmatprep.subr.mxu0 0.0
        %1558 = vmatpush1.msra.mxu0 %v945
        %1559 = vmatprep.subr.mxu0 0.0
        %1560 = vmatpush2.msra.mxu0 0.0
        %1561 = vmatprep.subr.mxu0 0.0
        %1562 = vmatpush2.msra.mxu0 0.0
        %1563 = vmatprep.subr.mxu0 0.0
        %1564 = vmatpush2.msra.mxu0 0.0
        %1565 = vmatprep.subr.mxu0 0.0
        %1566 = vmatpush2.msra.mxu0 0.0
        %1567 = vmatprep.subr.mxu0 0.0
        %1568 = vmatpush2.msra.mxu0 0.0
        %1569 = vmatprep.subr.mxu0 0.0
        %1570 = vmatpush2.msra.mxu0 0.0
        %1571 = vmatprep.subr.mxu0 0.0
        %1572 = vmatpush2.msra.mxu0 0.0
        %1573 = vmatprep.subr.mxu0 0.0
        %1574 = vmatpush2.msra.mxu0 0.0
        %1575 = vmatprep.subr.mxu0 0.0
        %1576 = vmatpush2.msra.mxu0 0.0
        %1577 = vmatprep.subr.mxu0 0.0
        %1578 = vmatpush2.msra.mxu0 0.0
        %1579 = vmatprep.subr.mxu0 0.0
        %1580 = vmatpush2.msra.mxu0 0.0
        %1581 = vmatprep.subr.mxu0 0.0
        %1582 = vmatpush2.msra.mxu0 0.0
        %1583 = vmatprep.subr.mxu0 0.0
        %1584 = vmatpush2.msra.mxu0 0.0
        %1585 = vmatprep.subr.mxu0 0.0
        %1586 = vmatpush2.msra.mxu0 0.0
        %1587 = vmatprep.subr.mxu0 0.0
        %1588 = vmatpush2.msra.mxu0 0.0
        %1589 = vmatprep.subr.mxu0 0.0
        %1590 = vmatpush2.msra.mxu0 0.0
        %1591 = vmatprep.mubr.f32.mxu0 0.0
        %1592 = vmatmul.mubr.f32.gmra.mxu0 %v1525
        %v1593 = vpop.f32.mrf.mxu0
        %v1594 = vadd.f32 0.0, %v1593
        %v1595 = vpop.f32.mrf.mxu0
        %1596 = vdwg.mxu0
        %1598 = vrot.lane.b32.xlu0 %v1448, 8
        %v1599 = vpop.permute.xlu0 %1598
        %1602 = vrot.lane.b32.xlu0 %v1521, 16
        %v1603 = vpop.permute.xlu0 %1602
        %1606 = vrot.lane.b32.xlu0 %v1594, 24
        %v1607 = vpop.permute.xlu0 %1606
        %v1609 = vsel %vm947, %v1375, %v1599
        %vm1610 = vcmask 130048
        %v1611 = vsel %vm1610, %v1609, %v1603
        %vm1612 = vcmask 195584
        %v1613 = vsel %vm1612, %v1611, %v1607
        %v1614 = vld [vmem:[#allocation13] sm:$0xff]
        %v1615 = vld [vmem:[#allocation13 + $0x8] sm:$0xff]
        %v1616 = vld [vmem:[#allocation13 + $0x10] sm:$0xff]
        %v1617 = vld [vmem:[#allocation13 + $0x18] sm:$0xff]
        %v1618 = vld [vmem:[%s11] sm:$0x1]
        %v1620 = vlaneseq
        %v1621 = vshrl.u32 %v1620, 7
        %v1622 = vsub.s32 0, %v1621
        %v1623 = vrot.slane %v1618, %v1622
        %v1626 = vsel %vm681, %v1613, 0
        %1628 = vmatprep.subr.mxu0 0.0
        %1629 = vmatpush1.msra.mxu0 0.0
        %1630 = vmatprep.subr.mxu0 0.0
        %1631 = vmatpush1.msra.mxu0 0.0
        %1632 = vmatprep.subr.mxu0 0.0
        %1633 = vmatpush1.msra.mxu0 0.0
        %1634 = vmatprep.subr.mxu0 0.0
        %1635 = vmatpush1.msra.mxu0 0.0
        %1636 = vmatprep.subr.mxu0 0.0
        %1637 = vmatpush1.msra.mxu0 0.0
        %1638 = vmatprep.subr.mxu0 0.0
        %1639 = vmatpush1.msra.mxu0 0.0
        %1640 = vmatprep.subr.mxu0 0.0
        %1641 = vmatpush1.msra.mxu0 0.0
        %1642 = vmatprep.subr.mxu0 0.0
        %1643 = vmatpush1.msra.mxu0 0.0
        %1644 = vmatprep.subr.mxu0 0.0
        %1645 = vmatpush1.msra.mxu0 0.0
        %1646 = vmatprep.subr.mxu0 0.0
        %1647 = vmatpush1.msra.mxu0 0.0
        %1648 = vmatprep.subr.mxu0 0.0
        %1649 = vmatpush1.msra.mxu0 0.0
        %1650 = vmatprep.subr.mxu0 0.0
        %1651 = vmatpush1.msra.mxu0 0.0
        %1652 = vmatprep.subr.mxu0 0.0
        %1653 = vmatpush1.msra.mxu0 %v1617
        %1654 = vmatprep.subr.mxu0 0.0
        %1655 = vmatpush1.msra.mxu0 %v1616
        %1656 = vmatprep.subr.mxu0 0.0
        %1657 = vmatpush1.msra.mxu0 %v1615
        %1658 = vmatprep.subr.mxu0 0.0
        %1659 = vmatpush1.msra.mxu0 %v1614
        %1660 = vmatprep.subr.mxu0 0.0
        %1661 = vmatpush2.msra.mxu0 0.0
        %1662 = vmatprep.subr.mxu0 0.0
        %1663 = vmatpush2.msra.mxu0 0.0
        %1664 = vmatprep.subr.mxu0 0.0
        %1665 = vmatpush2.msra.mxu0 0.0
        %1666 = vmatprep.subr.mxu0 0.0
        %1667 = vmatpush2.msra.mxu0 0.0
        %1668 = vmatprep.subr.mxu0 0.0
        %1669 = vmatpush2.msra.mxu0 0.0
        %1670 = vmatprep.subr.mxu0 0.0
        %1671 = vmatpush2.msra.mxu0 0.0
        %1672 = vmatprep.subr.mxu0 0.0
        %1673 = vmatpush2.msra.mxu0 0.0
        %1674 = vmatprep.subr.mxu0 0.0
        %1675 = vmatpush2.msra.mxu0 0.0
        %1676 = vmatprep.subr.mxu0 0.0
        %1677 = vmatpush2.msra.mxu0 0.0
        %1678 = vmatprep.subr.mxu0 0.0
        %1679 = vmatpush2.msra.mxu0 0.0
        %1680 = vmatprep.subr.mxu0 0.0
        %1681 = vmatpush2.msra.mxu0 0.0
        %1682 = vmatprep.subr.mxu0 0.0
        %1683 = vmatpush2.msra.mxu0 0.0
        %1684 = vmatprep.subr.mxu0 0.0
        %1685 = vmatpush2.msra.mxu0 0.0
        %1686 = vmatprep.subr.mxu0 0.0
        %1687 = vmatpush2.msra.mxu0 0.0
        %1688 = vmatprep.subr.mxu0 0.0
        %1689 = vmatpush2.msra.mxu0 0.0
        %1690 = vmatprep.subr.mxu0 0.0
        %1691 = vmatpush2.msra.mxu0 0.0
        %1692 = vmatprep.mubr.f32.mxu0 0.0
        %1693 = vmatmul.mubr.f32.gmra.mxu0 %v1626
        %v1694 = vpop.f32.mrf.mxu0
        %v1695 = vadd.f32 %v1623, %v1694
        %v1696 = vpop.f32.mrf.mxu0
        %1697 = vdwg.mxu0
        %v1698 = vadd.f32 %v1695, %v667
        %v1699 = vsel %vm681, %v1698, 0.0
        %1700 = vadd.xlane.f32.xlu0 %v1699
        %v1701 = vpop.xlane.xlu0 %1700
        %v1702 = vrcp.pop 32.0
        %v1703 = vmul.f32 %v1701, %v1702
        %v1704 = vsub.f32 %v1698, %v1703
        %v1705 = vmul.f32 %v1704, %v1704
        %v1706 = vsel %vm681, %v1705, 0.0
        %1707 = vadd.xlane.f32.xlu0 %v1706
        %v1708 = vpop.xlane.xlu0 %1707
        %v1709 = vmul.f32 %v1708, %v1702
        %v1710 = vadd.f32 %v1709, 1e-05
        %v1711 = vrsqrt.pop %v1710
        %v1712 = vmul.f32 %v1704, %v1711
        %v1713 = vld [vmem:[%s12] sm:$0x1]
        %v1715 = vlaneseq
        %v1716 = vshrl.u32 %v1715, 7
        %v1717 = vsub.s32 0, %v1716
        %v1718 = vrot.slane %v1713, %v1717
        %v1720 = vmul.f32 %v1712, %v1718
        %v1721 = vld [vmem:[%s13] sm:$0x1]
        %v1723 = vlaneseq
        %v1724 = vshrl.u32 %v1723, 7
        %v1725 = vsub.s32 0, %v1724
        %v1726 = vrot.slane %v1721, %v1725
        %v1728 = vadd.f32 %v1720, %v1726
        %1729 = vst.msk [vmem:[%s655] sm:$0xff] %vm681, %v1728
        %s1730 = sand.u32 %s363, 1
        %s1731 = scalar_lea.sflag [#allocation4], %s1730
        %s1732 = sand.u32 %s363, 1
        %s1733 = smul.addr %s1732, 8
        %s1734 = scalar_lea.vmem [#allocation14], %s1733
        %s1735 = sand.u32 %s389, 1
        %s1736 = scalar_lea.sflag [#allocation16], %s1735
        %s1737 = sand.u32 %s389, 1
        %s1738 = smul.addr %s1737, 32
        %s1739 = scalar_lea.vmem [#allocation15], %s1738
        // Predicated region
        $region105: #{tpu_custom_call.1} parent=75 // pred_check
          %p1740 = pneg %p373
        $region106: #{tpu_custom_call.1} parent=75 // pred_check_branch
          %1742 = sbr.rel (%p1740) target = $region108
        $region107: #{tpu_custom_call.1} parent=75 // pred_region
          %s1744 = ssub.s32 128, 128
          %1745 = vsyncadd %s1731, %s1744
          %s1746 = smul.addr %s41, 128
          %s1747 = scalar_lea.hbm %s14, %s1746
          %s1749 = sshll.u32 %s1734, 4
          %s1750 = int_to_ptr.vmem [resolvable:$true] %s1749
          %1752 = dma.vmem_to_hbm [thread:$0]  %s1750, 128, %s1747, %s1731
        $region108: #{tpu_custom_call.1} parent=75 // pred_fallthru
          _
        // Predicated region
        $region109: #{tpu_custom_call.1} parent=75 // pred_check
          %p1753 = pneg %p399
        $region110: #{tpu_custom_call.1} parent=75 // pred_check_branch
          %1755 = sbr.rel (%p1753) target = $region112
        $region111: #{tpu_custom_call.1} parent=75 // pred_region
          %s1757 = ssub.s32 512, 512
          %1758 = vsyncadd %s1736, %s1757
          %s1759 = smul.addr %s41, 4
          %s1760 = smul.addr %s1759, 128
          %s1761 = scalar_lea.hbm %s15, %s1760
          %s1762 = sshll.u32 %s1739, 4
          %s1763 = int_to_ptr.vmem [resolvable:$true] %s1762
          %1768 = dma.vmem_to_hbm [thread:$0]  %s1763, 512, %s1761, %s1736, 128, 128, 8
        $region112: #{tpu_custom_call.1} parent=75 // pred_fallthru
          _
      $region76: #{tpu_custom_call.1} parent=5 // pred_fallthru
        _
      %p1769 = scmp.le.s32.totalorder 2, %s36
      // Predicated region
      $region113: #{tpu_custom_call.1} parent=5 // pred_check
        %p1770 = pneg %p1769
      $region114: #{tpu_custom_call.1} parent=5 // pred_check_branch
        %1772 = sbr.rel (%p1770) target = $region116
      $region115: #{tpu_custom_call.1} parent=5 // pred_region
        %s1773 = ssub.s32 %s36, 2
        // Predicated region
        $region117: #{tpu_custom_call.1} parent=115 // pred_check
          %p1774 = pneg %p379
        $region118: #{tpu_custom_call.1} parent=115 // pred_check_branch
          %1776 = sbr.rel (%p1774) target = $region120
        $region119: #{tpu_custom_call.1} parent=115 // pred_region
          %s1777 = sand.u32 %s364, 1
          %s1778 = scalar_lea.sflag [#allocation4], %s1777
          %s1779 = sand.u32 %s364, 1
          %s1780 = smul.addr %s1779, 8
          %s1781 = scalar_lea.vmem [#allocation14], %s1780
          %1782 = dma.done %s1778, 128
        $region120: #{tpu_custom_call.1} parent=115 // pred_fallthru
          _
        // Predicated region
        $region121: #{tpu_custom_call.1} parent=115 // pred_check
          %p1783 = pneg %p405
        $region122: #{tpu_custom_call.1} parent=115 // pred_check_branch
          %1785 = sbr.rel (%p1783) target = $region124
        $region123: #{tpu_custom_call.1} parent=115 // pred_region
          %s1786 = sand.u32 %s390, 1
          %s1787 = scalar_lea.sflag [#allocation16], %s1786
          %s1788 = sand.u32 %s390, 1
          %s1789 = smul.addr %s1788, 32
          %s1790 = scalar_lea.vmem [#allocation15], %s1789
          %1791 = dma.done %s1787, 512
        $region124: #{tpu_custom_call.1} parent=115 // pred_fallthru
          _
      $region116: #{tpu_custom_call.1} parent=5 // pred_fallthru
        _
    $region6: #{tpu_custom_call.1} parent=1 // loop_footer
      %s40 = sadd.s32 1, %s36
    $region7: #{tpu_custom_call.1} parent=1 // loop_footer_branch
      %35 = sbr.rel target = $region3
    $region8: #{tpu_custom_call.1} parent=1 // loop_exit
      _
    %1792 = vsyncpa [#allocation3], 1
    %s1793 = scalar_lea.sflag [#allocation3], 1
    %1794 = vsyncpa %s1793, 1
    %1795 = vsyncpa [#allocation6], 1
    %s1796 = scalar_lea.sflag [#allocation6], 1
    %1797 = vsyncpa %s1796, 1
    %1798 = vsyncpa [#allocation9], 1
    %1799 = vsyncpa [#allocation12], 1
    %1800 = vsyncpa [#allocation4], 1
    %s1801 = scalar_lea.sflag [#allocation4], 1
    %1802 = vsyncpa %s1801, 1
    %1803 = vsyncpa [#allocation16], 1
    %s1804 = scalar_lea.sflag [#allocation16], 1
    %1805 = vsyncpa %s1804, 1

</llo_original>
